<compile_context>
chip_gen: v5e
topology: v5e:2x2
jax: 0.10.0
libtpu: 0.0.40
codegen_flags: <defaults>
</compile_context>

<pallas_src>
import functools

import jax
import jax.numpy as jnp
from jax import lax
from jax.experimental import pallas as pl
from jax.experimental.pallas import tpu as pltpu


# ----------------------------------------------------------------------------
# helpers
# ----------------------------------------------------------------------------
def _round_up(v, m):
    return -(-v // m) * m


def _round_up_128(v):
    return max(128, _round_up(v, 128))


def _gather_rows(a, rows):
    """Static row gather on a 2D (R, C) value via unit-row slices + concat."""
    pieces = [a[r:r + 1] for r in rows]
    return pieces[0] if len(pieces) == 1 else jnp.concatenate(pieces, axis=0)


# ----------------------------------------------------------------------------
# Pallas kernel: `nb` images per grid step; activations are 2D (pixels, channels)
# with channels lane-dense (multiples of 128) and pixels padded to sublane tiles.
# ----------------------------------------------------------------------------
def conv_block_kernel(x_ref, w01_ref, b1_ref, bs_ref, w2_ref, b2_ref,
                      w3_ref, b3_ref, o_ref, *, nb, H, W, HWp, f, s):
    F1p = b1_ref.shape[1]
    F3p = bs_ref.shape[1]
    Hs, Ws = (H - 1) // s + 1, (W - 1) // s + 1        # shortcut conv, stride s
    H2, W2 = (H - f) // s + 1, (W - f) // s + 1        # f x f conv, stride s
    H3, W3 = (H2 - 1) // 2 + 1, (W2 - 1) // 2 + 1      # stride-2 1x1 conv
    Hout, Wout = max(H3, Hs), max(W3, Ws)

    x = x_ref[...]                                     # (nb*HWp, Cp) bf16

    # Fused 1x1 GEMM over every pixel: columns [0:F1p) = main-branch conv1 (BN1
    # scale folded), columns [F1p:F1p+F3p) = shortcut conv (BNs scale folded).
    y01 = jnp.dot(x, w01_ref[...], preferred_element_type=jnp.float32)

    # Main conv1 epilogue: folded-BN bias + ReLU (f32; bf16 cast happens per patch).
    y1 = jnp.maximum(y01[:, :F1p] + b1_ref[...], 0.0)

    # Shortcut: stride-s pixel selection on the f32 GEMM output + folded-BN bias.
    sc_rows = [n * HWp + (i * s) * W + (j * s)
               for n in range(nb) for i in range(Hs) for j in range(Ws)]
    sc = _gather_rows(y01[:, F1p:F1p + F3p], sc_rows) + bs_ref[...]   # (nb*Hs*Ws, F3p)

    # f x f conv with its stride composed with the following stride-2 1x1 conv:
    # only the H3 x W3 output pixels conv3 reads are computed (effective stride
    # 2*s), as one im2col GEMM with K = f*f*F1p (register/MRB accumulation).
    slabs = []
    for di in range(f):
        for dj in range(f):
            rows = [n * HWp + (2 * s * i + di) * W + (2 * s * j + dj)
                    for n in range(nb) for i in range(H3) for j in range(W3)]
            slabs.append(_gather_rows(y1, rows))       # (nb*H3*W3, F1p) f32
    patch = jnp.concatenate(slabs, axis=-1).astype(jnp.bfloat16)   # (M3, f*f*F1p)
    y2 = jnp.dot(patch, w2_ref[...], preferred_element_type=jnp.float32)
    y2 = jnp.maximum(y2 + b2_ref[...], 0.0).astype(jnp.bfloat16)   # (M3, F2p)

    # conv3 (1x1; its stride was composed above) + folded-BN bias.
    y3 = jnp.dot(y2, w3_ref[...], preferred_element_type=jnp.float32) + b3_ref[...]

    # Residual broadcast add (PyTorch `X + batch_1`) + ReLU, lane-dense store.
    if H3 == Hs and W3 == Ws:
        out = jnp.maximum(y3 + sc, 0.0)
    else:
        out = jnp.maximum(y3.reshape(nb, H3, W3, F3p)
                          + sc.reshape(nb, Hs, Ws, F3p), 0.0)
    o_ref[...] = out.reshape(nb, Hout * Wout, F3p).astype(o_ref.dtype)


# ----------------------------------------------------------------------------
# wrapper: NHWC in -> NHWC out.
# ----------------------------------------------------------------------------
def conv_block_pallas(x_nhwc, kparams, filters, f, s, batch_block=None):
    (w01k, b1k, bsk, w2k, b2k, w3k, b3k) = kparams
    F1, F2, F3 = filters
    N, H, W, Cin = x_nhwc.shape
    Cp = w01k.shape[0]
    F1p, F3p = b1k.shape[1], bsk.shape[1]

    H2, W2 = (H - f) // s + 1, (W - f) // s + 1
    H3, W3 = (H2 - 1) // 2 + 1, (W2 - 1) // 2 + 1
    Hs, Ws = (H - 1) // s + 1, (W - 1) // s + 1
    assert H2 >= 1 and W2 >= 1, "input too small for the f x f VALID conv"
    # Same condition under which the PyTorch `X + batch_1` add is defined.
    assert (H3 == Hs or H3 == 1 or Hs == 1) and (W3 == Ws or W3 == 1 or Ws == 1), \
        "ConvBlock residual add does not broadcast for this input size"
    Hout, Wout = max(H3, Hs), max(W3, Ws)

    if batch_block is None:
        # >= 2 grid steps so both v7x TensorCores get a block; images within a
        # step are folded into the GEMM M dimension (friendly to 1-TC v5e/v6e).
        batch_block = N // 2 if (N >= 2 and N % 2 == 0) else 1
    assert N % batch_block == 0
    nsteps = N // batch_block

    # Pixels on sublanes (padded to a multiple of 8), channels lane-dense.
    HWp = _round_up(H * W, 8)
    xp = jnp.pad(x_nhwc.reshape(N, H * W, Cin),
                 ((0, 0), (0, HWp - H * W), (0, Cp - Cin)))
    xp = xp.reshape(N * HWp, Cp).astype(jnp.bfloat16)

    kernel = functools.partial(conv_block_kernel, nb=batch_block,
                               H=H, W=W, HWp=HWp, f=f, s=s)

    # True (unpadded) flop count; bytes are the arrays actually moved.
    flops = 2 * N * (H * W * Cin * F1 + Hs * Ws * Cin * F3
                     + H3 * W3 * f * f * F1 * F2 + H3 * W3 * F2 * F3)
    bytes_accessed = (int(xp.size) * xp.dtype.itemsize
                      + sum(int(p.size) * p.dtype.itemsize for p in kparams)
                      + N * Hout * Wout * F3p * 4)

    grid_spec = pltpu.PrefetchScalarGridSpec(
        num_scalar_prefetch=0,
        grid=(nsteps,),
        in_specs=[
            pl.BlockSpec((batch_block * HWp, Cp), lambda b: (b, 0)),
            # Weights/biases: constant index maps -> fetched once, reused.
            pl.BlockSpec(w01k.shape, lambda b: (0, 0)),
            pl.BlockSpec(b1k.shape, lambda b: (0, 0)),
            pl.BlockSpec(bsk.shape, lambda b: (0, 0)),
            pl.BlockSpec(w2k.shape, lambda b: (0, 0)),
            pl.BlockSpec(b2k.shape, lambda b: (0, 0)),
            pl.BlockSpec(w3k.shape, lambda b: (0, 0)),
            pl.BlockSpec(b3k.shape, lambda b: (0, 0)),
        ],
        out_specs=pl.BlockSpec((batch_block, Hout * Wout, F3p),
                               lambda b: (b, 0, 0)),
    )

    out = pl.pallas_call(
        kernel,
        out_shape=jax.ShapeDtypeStruct((N, Hout * Wout, F3p), jnp.float32),
        grid_spec=grid_spec,
        compiler_params=pltpu.CompilerParams(
            dimension_semantics=("parallel",),
            vmem_limit_bytes=32 * 1024 * 1024),
        cost_estimate=pl.CostEstimate(flops=int(flops), transcendentals=0,
                                      bytes_accessed=int(bytes_accessed)),
    )(xp, w01k, b1k, bsk, w2k, b2k, w3k, b3k)

    return out[:, :, :F3].reshape(N, Hout, Wout, F3)   # drop lane padding


# ----------------------------------------------------------------------------
# Deterministic parameters (PyTorch OIHW layout) + kernel-ready folded versions.
# ----------------------------------------------------------------------------
def make_params(key, in_channels, filters, f, s, eps=1e-5):
    F1, F2, F3 = filters
    ks = jax.random.split(key, 8)

    def bn_params(k, c):
        kg, kb, km, kv = jax.random.split(k, 4)
        gamma = jax.random.uniform(kg, (c,), jnp.float32, 0.5, 1.5)
        beta = 0.1 * jax.random.normal(kb, (c,), jnp.float32)
        mean = 0.1 * jax.random.normal(km, (c,), jnp.float32)
        var = jax.random.uniform(kv, (c,), jnp.float32, 0.5, 1.5)
        return gamma, beta, mean, var

    def fold(bn):
        g, b, m, v = bn
        scale = g / jnp.sqrt(v + eps)
        return scale, b - m * scale

    # PyTorch conv weights (Cout, Cin, kH, kW), bias=False as in the module.
    w1_t = 0.1 * jax.random.normal(ks[0], (F1, in_channels, 1, 1), jnp.float32)
    w2_t = 0.1 * jax.random.normal(ks[1], (F2, F1, f, f), jnp.float32)
    w3_t = 0.1 * jax.random.normal(ks[2], (F3, F2, 1, 1), jnp.float32)
    ws_t = 0.1 * jax.random.normal(ks[3], (F3, in_channels, 1, 1), jnp.float32)
    bn1, bn2 = bn_params(ks[4], F1), bn_params(ks[5], F2)
    bn3, bns = bn_params(ks[6], F3), bn_params(ks[7], F3)

    s1, b1 = fold(bn1)
    s2, b2 = fold(bn2)
    s3, b3 = fold(bn3)
    ss, bs = fold(bns)

    Cp, F1p, F2p, F3p = (_round_up_128(c) for c in (in_channels, F1, F2, F3))

    def pad2(a, r, c):
        return jnp.pad(a, ((0, r - a.shape[0]), (0, c - a.shape[1])))

    def pad1(b, c):
        return jnp.pad(b, (0, c - b.shape[0])).reshape(1, c).astype(jnp.float32)

    # Fuse conv1 + shortcut 1x1 weights (BN scales folded) into one 256-wide RHS.
    w1m = pad2(w1_t[:, :, 0, 0].T * s1[None, :], Cp, F1p)
    wsm = pad2(ws_t[:, :, 0, 0].T * ss[None, :], Cp, F3p)
    w01k = jnp.concatenate([w1m, wsm], axis=1).astype(jnp.bfloat16)   # (Cp, F1p+F3p)

    # conv2 weights packed for the single im2col GEMM: row (di*f+dj)*F1p + cin.
    w2hwio = jnp.transpose(w2_t, (2, 3, 1, 0)) * s2[None, None, None, :]  # (f,f,F1,F2)
    w2k = jnp.pad(w2hwio, ((0, 0), (0, 0), (0, F1p - F1), (0, F2p - F2)))
    w2k = w2k.reshape(f * f * F1p, F2p).astype(jnp.bfloat16)

    w3k = pad2(w3_t[:, :, 0, 0].T * s3[None, :], F2p, F3p).astype(jnp.bfloat16)

    b1k, b2k, b3k, bsk = pad1(b1, F1p), pad1(b2, F2p), pad1(b3, F3p), pad1(bs, F3p)

    kparams = (w01k, b1k, bsk, w2k, b2k, w3k, b3k)
    tparams = (w1_t, bn1, w2_t, bn2, w3_t, bn3, ws_t, bns)
    return kparams, tparams


# ----------------------------------------------------------------------------
# Pure-JAX NCHW reference mirroring the PyTorch ConvBlock (eval-mode BN).
# ----------------------------------------------------------------------------
def reference_forward(x_nchw, tparams, s, eps=1e-5):
    (w1_t, bn1, w2_t, bn2, w3_t, bn3, ws_t, bns) = tparams
    dn = ('NCHW', 'OIHW', 'NCHW')

    def conv(a, w, st):
        return lax.conv_general_dilated(a, w, (st, st), 'VALID',
                                        dimension_numbers=dn)

    def bn(a, p):
        g, b, m, v = (t.reshape(1, -1, 1, 1) for t in p)
        return g * (a - m) / jnp.sqrt(v + eps) + b

    shortcut = bn(conv(x_nchw, ws_t, s), bns)
    y = jax.nn.relu(bn(conv(x_nchw, w1_t, 1), bn1))
    y = jax.nn.relu(bn(conv(y, w2_t, s), bn2))
    y = bn(conv(y, w3_t, 2), bn3)
    return jax.nn.relu(y + shortcut)                 # PyTorch broadcast add


if __name__ == "__main__":
    # ConvBlock(in_channels=4, filter=(8, 16, 8), s=2, f=3) on a 6x6 input:
    # main branch 6x6 -> 6x6 -> 2x2 -> 1x1, shortcut 6x6 -> 3x3,
    # residual add broadcasts (1x1)+(3x3) exactly like the PyTorch `X + batch_1`.
    N, Cin, H, W = 2, 4, 6, 6
    filters = (8, 16, 8)
    f, s = 3, 2

    key = jax.random.PRNGKey(0)
    kx, kp = jax.random.split(key)
    x_nchw = jax.random.normal(kx, (N, Cin, H, W), jnp.float32)

    kparams, tparams = make_params(kp, Cin, filters, f, s)

    # Kernel is NHWC/2D-native (channels on lanes); the relayout lives only in
    # this test harness, not in the kernel/wrapper path.
    x_nhwc = jnp.transpose(x_nchw, (0, 2, 3, 1))
    out_nhwc = conv_block_pallas(x_nhwc, kparams, filters, f, s)
    out_nhwc = jax.block_until_ready(out_nhwc)

    ref_nchw = reference_forward(x_nchw, tparams, s)
    out_nchw = jnp.transpose(out_nhwc, (0, 3, 1, 2))
    assert out_nchw.shape == ref_nchw.shape, (out_nchw.shape, ref_nchw.shape)
    err = float(jnp.max(jnp.abs(out_nchw - ref_nchw)))
    assert jnp.allclose(out_nchw, ref_nchw, rtol=2e-2, atol=2e-2), err

    print("KERNEL_OK")
</pallas_src>

<mosaic_0001>
module attributes {stable_mosaic.version = 11 : i64} {
  func.func @conv_block_kernel(%arg0: i32, %arg1: memref<40x128xbf16, #tpu.memory_space<vmem>>, %arg2: memref<128x256xbf16, #tpu.memory_space<vmem>>, %arg3: memref<1x128xf32, #tpu.memory_space<vmem>>, %arg4: memref<1x128xf32, #tpu.memory_space<vmem>>, %arg5: memref<1152x128xbf16, #tpu.memory_space<vmem>>, %arg6: memref<1x128xf32, #tpu.memory_space<vmem>>, %arg7: memref<128x128xbf16, #tpu.memory_space<vmem>>, %arg8: memref<1x128xf32, #tpu.memory_space<vmem>>, %arg9: memref<1x9x128xf32, #tpu.memory_space<vmem>>) attributes {dimension_semantics = [#tpu.dimension_semantics<parallel>], iteration_bounds = array<i64: 2>, scalar_prefetch = 0 : i64, scratch_operands = 0 : i64, tpu.core_type = #tpu.core_type<tc>, window_params = [{transform_indices = @transform_0, window_bounds = array<i64: 40, 128>}, {pipeline_mode = #tpu.pipeline_mode<synchronous>, transform_indices = @transform_1, window_bounds = array<i64: 128, 256>}, {pipeline_mode = #tpu.pipeline_mode<synchronous>, transform_indices = @transform_2, window_bounds = array<i64: 1, 128>}, {pipeline_mode = #tpu.pipeline_mode<synchronous>, transform_indices = @transform_3, window_bounds = array<i64: 1, 128>}, {pipeline_mode = #tpu.pipeline_mode<synchronous>, transform_indices = @transform_4, window_bounds = array<i64: 1152, 128>}, {pipeline_mode = #tpu.pipeline_mode<synchronous>, transform_indices = @transform_5, window_bounds = array<i64: 1, 128>}, {pipeline_mode = #tpu.pipeline_mode<synchronous>, transform_indices = @transform_6, window_bounds = array<i64: 128, 128>}, {pipeline_mode = #tpu.pipeline_mode<synchronous>, transform_indices = @transform_7, window_bounds = array<i64: 1, 128>}, {transform_indices = @transform_8, window_bounds = array<i64: 1, 9, 128>}]} {
    %c0 = arith.constant 0 : index
    %c0_0 = arith.constant 0 : index
    %0 = vector.load %arg1[%c0, %c0_0] : memref<40x128xbf16, #tpu.memory_space<vmem>>, vector<40x128xbf16>
    %c0_1 = arith.constant 0 : index
    %c0_2 = arith.constant 0 : index
    %1 = vector.load %arg2[%c0_1, %c0_2] : memref<128x256xbf16, #tpu.memory_space<vmem>>, vector<128x256xbf16>
    %cst = arith.constant dense<0.000000e+00> : vector<40x256xf32>
    %2 = tpu.matmul %0, %1, %cst {dimension_numbers = #tpu.dot_dimension_numbers<[1], [0], [0], [1], [0, 0, 1, 1], [], []>} : vector<40x128xbf16>, vector<128x256xbf16>, vector<40x256xf32> -> vector<40x256xf32>
    %3 = vector.extract_strided_slice %2 {offsets = [0, 0], sizes = [40, 128], strides = [1, 1]} : vector<40x256xf32> to vector<40x128xf32>
    %c0_3 = arith.constant 0 : index
    %c0_4 = arith.constant 0 : index
    %4 = vector.load %arg3[%c0_3, %c0_4] : memref<1x128xf32, #tpu.memory_space<vmem>>, vector<1x128xf32>
    %5 = vector.broadcast %4 : vector<1x128xf32> to vector<40x128xf32>
    %6 = arith.addf %3, %5 : vector<40x128xf32>
    %cst_5 = arith.constant 0.000000e+00 : f32
    %7 = vector.broadcast %cst_5 : f32 to vector<40x128xf32>
    %8 = arith.maximumf %6, %7 : vector<40x128xf32>
    %9 = vector.extract_strided_slice %2 {offsets = [0, 128], sizes = [40, 128], strides = [1, 1]} : vector<40x256xf32> to vector<40x128xf32>
    %10 = vector.extract_strided_slice %9 {offsets = [0, 0], sizes = [1, 128], strides = [1, 1]} : vector<40x128xf32> to vector<1x128xf32>
    %11 = vector.extract_strided_slice %9 {offsets = [2, 0], sizes = [1, 128], strides = [1, 1]} : vector<40x128xf32> to vector<1x128xf32>
    %12 = vector.extract_strided_slice %9 {offsets = [4, 0], sizes = [1, 128], strides = [1, 1]} : vector<40x128xf32> to vector<1x128xf32>
    %13 = vector.extract_strided_slice %9 {offsets = [12, 0], sizes = [1, 128], strides = [1, 1]} : vector<40x128xf32> to vector<1x128xf32>
    %14 = vector.extract_strided_slice %9 {offsets = [14, 0], sizes = [1, 128], strides = [1, 1]} : vector<40x128xf32> to vector<1x128xf32>
    %15 = vector.extract_strided_slice %9 {offsets = [16, 0], sizes = [1, 128], strides = [1, 1]} : vector<40x128xf32> to vector<1x128xf32>
    %16 = vector.extract_strided_slice %9 {offsets = [24, 0], sizes = [1, 128], strides = [1, 1]} : vector<40x128xf32> to vector<1x128xf32>
    %17 = vector.extract_strided_slice %9 {offsets = [26, 0], sizes = [1, 128], strides = [1, 1]} : vector<40x128xf32> to vector<1x128xf32>
    %18 = vector.extract_strided_slice %9 {offsets = [28, 0], sizes = [1, 128], strides = [1, 1]} : vector<40x128xf32> to vector<1x128xf32>
    %19 = tpu.concatenate %10, %11, %12, %13, %14, %15, %16, %17, %18 in 0 : vector<1x128xf32>, vector<1x128xf32>, vector<1x128xf32>, vector<1x128xf32>, vector<1x128xf32>, vector<1x128xf32>, vector<1x128xf32>, vector<1x128xf32>, vector<1x128xf32> -> vector<9x128xf32>
    %c0_6 = arith.constant 0 : index
    %c0_7 = arith.constant 0 : index
    %20 = vector.load %arg4[%c0_6, %c0_7] : memref<1x128xf32, #tpu.memory_space<vmem>>, vector<1x128xf32>
    %21 = vector.broadcast %20 : vector<1x128xf32> to vector<9x128xf32>
    %22 = arith.addf %19, %21 : vector<9x128xf32>
    %23 = vector.extract_strided_slice %8 {offsets = [0, 0], sizes = [1, 128], strides = [1, 1]} : vector<40x128xf32> to vector<1x128xf32>
    %24 = vector.extract_strided_slice %8 {offsets = [1, 0], sizes = [1, 128], strides = [1, 1]} : vector<40x128xf32> to vector<1x128xf32>
    %25 = vector.extract_strided_slice %8 {offsets = [2, 0], sizes = [1, 128], strides = [1, 1]} : vector<40x128xf32> to vector<1x128xf32>
    %26 = vector.extract_strided_slice %8 {offsets = [6, 0], sizes = [1, 128], strides = [1, 1]} : vector<40x128xf32> to vector<1x128xf32>
    %27 = vector.extract_strided_slice %8 {offsets = [7, 0], sizes = [1, 128], strides = [1, 1]} : vector<40x128xf32> to vector<1x128xf32>
    %28 = vector.extract_strided_slice %8 {offsets = [8, 0], sizes = [1, 128], strides = [1, 1]} : vector<40x128xf32> to vector<1x128xf32>
    %29 = vector.extract_strided_slice %8 {offsets = [12, 0], sizes = [1, 128], strides = [1, 1]} : vector<40x128xf32> to vector<1x128xf32>
    %30 = vector.extract_strided_slice %8 {offsets = [13, 0], sizes = [1, 128], strides = [1, 1]} : vector<40x128xf32> to vector<1x128xf32>
    %31 = vector.extract_strided_slice %8 {offsets = [14, 0], sizes = [1, 128], strides = [1, 1]} : vector<40x128xf32> to vector<1x128xf32>
    %32 = tpu.concatenate %23, %24, %25, %26, %27, %28, %29, %30, %31 in 1 : vector<1x128xf32>, vector<1x128xf32>, vector<1x128xf32>, vector<1x128xf32>, vector<1x128xf32>, vector<1x128xf32>, vector<1x128xf32>, vector<1x128xf32>, vector<1x128xf32> -> vector<1x1152xf32>
    %33 = arith.truncf %32 : vector<1x1152xf32> to vector<1x1152xbf16>
    %c0_8 = arith.constant 0 : index
    %c0_9 = arith.constant 0 : index
    %34 = vector.load %arg5[%c0_8, %c0_9] : memref<1152x128xbf16, #tpu.memory_space<vmem>>, vector<1152x128xbf16>
    %cst_10 = arith.constant dense<0.000000e+00> : vector<1x128xf32>
    %35 = tpu.matmul %33, %34, %cst_10 {dimension_numbers = #tpu.dot_dimension_numbers<[1], [0], [0], [1], [0, 0, 1, 1], [], []>} : vector<1x1152xbf16>, vector<1152x128xbf16>, vector<1x128xf32> -> vector<1x128xf32>
    %c0_11 = arith.constant 0 : index
    %c0_12 = arith.constant 0 : index
    %36 = vector.load %arg6[%c0_11, %c0_12] : memref<1x128xf32, #tpu.memory_space<vmem>>, vector<1x128xf32>
    %37 = arith.addf %35, %36 : vector<1x128xf32>
    %cst_13 = arith.constant 0.000000e+00 : f32
    %38 = vector.broadcast %cst_13 : f32 to vector<1x128xf32>
    %39 = arith.maximumf %37, %38 : vector<1x128xf32>
    %40 = arith.truncf %39 : vector<1x128xf32> to vector<1x128xbf16>
    %c0_14 = arith.constant 0 : index
    %c0_15 = arith.constant 0 : index
    %41 = vector.load %arg7[%c0_14, %c0_15] : memref<128x128xbf16, #tpu.memory_space<vmem>>, vector<128x128xbf16>
    %cst_16 = arith.constant dense<0.000000e+00> : vector<1x128xf32>
    %42 = tpu.matmul %40, %41, %cst_16 {dimension_numbers = #tpu.dot_dimension_numbers<[1], [0], [0], [1], [0, 0, 1, 1], [], []>} : vector<1x128xbf16>, vector<128x128xbf16>, vector<1x128xf32> -> vector<1x128xf32>
    %c0_17 = arith.constant 0 : index
    %c0_18 = arith.constant 0 : index
    %43 = vector.load %arg8[%c0_17, %c0_18] : memref<1x128xf32, #tpu.memory_space<vmem>>, vector<1x128xf32>
    %44 = arith.addf %42, %43 : vector<1x128xf32>
    %45 = vector.shape_cast %44 : vector<1x128xf32> to vector<1x1x1x128xf32>
    %46 = vector.shape_cast %22 : vector<9x128xf32> to vector<1x3x3x128xf32>
    %47 = vector.broadcast %45 : vector<1x1x1x128xf32> to vector<1x3x3x128xf32>
    %48 = arith.addf %47, %46 : vector<1x3x3x128xf32>
    %cst_19 = arith.constant 0.000000e+00 : f32
    %49 = vector.broadcast %cst_19 : f32 to vector<1x3x3x128xf32>
    %50 = arith.maximumf %48, %49 : vector<1x3x3x128xf32>
    %51 = vector.shape_cast %50 : vector<1x3x3x128xf32> to vector<1x9x128xf32>
    %c0_20 = arith.constant 0 : index
    %c0_21 = arith.constant 0 : index
    %c0_22 = arith.constant 0 : index
    %52 = vector.load %arg9[%c0_20, %c0_21, %c0_22] : memref<1x9x128xf32, #tpu.memory_space<vmem>>, vector<1x9x128xf32>
    tpu.vector_store %arg9[%c0_20, %c0_21, %c0_22], %51 {strides = array<i32>} : memref<1x9x128xf32, #tpu.memory_space<vmem>>, vector<1x9x128xf32>,
    return
  }
  func.func @transform_0(%arg0: i32) -> (i32, i32) {
    %c0_i32 = arith.constant 0 : i32
    %c0_i32_0 = arith.constant 0 : i32
    return %arg0, %c0_i32 : i32, i32
  }
  func.func @transform_1(%arg0: i32) -> (i32, i32) {
    %c0_i32 = arith.constant 0 : i32
    %c0_i32_0 = arith.constant 0 : i32
    %c0_i32_1 = arith.constant 0 : i32
    return %c0_i32, %c0_i32_0 : i32, i32
  }
  func.func @transform_2(%arg0: i32) -> (i32, i32) {
    %c0_i32 = arith.constant 0 : i32
    %c0_i32_0 = arith.constant 0 : i32
    %c0_i32_1 = arith.constant 0 : i32
    return %c0_i32, %c0_i32_0 : i32, i32
  }
  func.func @transform_3(%arg0: i32) -> (i32, i32) {
    %c0_i32 = arith.constant 0 : i32
    %c0_i32_0 = arith.constant 0 : i32
    %c0_i32_1 = arith.constant 0 : i32
    return %c0_i32, %c0_i32_0 : i32, i32
  }
  func.func @transform_4(%arg0: i32) -> (i32, i32) {
    %c0_i32 = arith.constant 0 : i32
    %c0_i32_0 = arith.constant 0 : i32
    %c0_i32_1 = arith.constant 0 : i32
    return %c0_i32, %c0_i32_0 : i32, i32
  }
  func.func @transform_5(%arg0: i32) -> (i32, i32) {
    %c0_i32 = arith.constant 0 : i32
    %c0_i32_0 = arith.constant 0 : i32
    %c0_i32_1 = arith.constant 0 : i32
    return %c0_i32, %c0_i32_0 : i32, i32
  }
  func.func @transform_6(%arg0: i32) -> (i32, i32) {
    %c0_i32 = arith.constant 0 : i32
    %c0_i32_0 = arith.constant 0 : i32
    %c0_i32_1 = arith.constant 0 : i32
    return %c0_i32, %c0_i32_0 : i32, i32
  }
  func.func @transform_7(%arg0: i32) -> (i32, i32) {
    %c0_i32 = arith.constant 0 : i32
    %c0_i32_0 = arith.constant 0 : i32
    %c0_i32_1 = arith.constant 0 : i32
    return %c0_i32, %c0_i32_0 : i32, i32
  }
  func.func @transform_8(%arg0: i32) -> (i32, i32, i32) {
    %c0_i32 = arith.constant 0 : i32
    %c0_i32_0 = arith.constant 0 : i32
    %c0_i32_1 = arith.constant 0 : i32
    return %arg0, %c0_i32, %c0_i32_0 : i32, i32, i32
  }
}

</mosaic_0001>

<llo_original>
// kernel: tpu_custom_call.1
$region0: #{tpu_custom_call.1}
  #allocation0 [shape = 'u32[]', space=smem, size = 0x4, offset = 0x4, fixed_abs, tag = 'smem constant byte address 0x4 - core index']
  #allocation1 [shape = 'u32[72,128]{1,0:T(1,128)}', space=vmem, size = 0x9000, scoped, tag = 'internal scratch']
  %s0 = inlined_call_operand.hbm [shape: bf16[80,128], index: 0, kind: input, shape index: {}]
  %s1 = inlined_call_operand.hbm [shape: bf16[128,256], index: 1, kind: input, shape index: {}]
  %s2 = inlined_call_operand.vmem [shape: f32[1,128], index: 2, kind: input, shape index: {}]
  %s3 = inlined_call_operand.vmem [shape: f32[1,128], index: 3, kind: input, shape index: {}]
  %s4 = inlined_call_operand.hbm [shape: bf16[1152,128], index: 4, kind: input, shape index: {}]
  %s5 = inlined_call_operand.vmem [shape: f32[1,128], index: 5, kind: input, shape index: {}]
  %s6 = inlined_call_operand.hbm [shape: bf16[128,128], index: 6, kind: input, shape index: {}]
  %s7 = inlined_call_operand.vmem [shape: f32[1,128], index: 7, kind: input, shape index: {}]
  %s8 = inlined_call_operand.vmem [shape: f32[2,9,128], index: 8, kind: output, shape index: {}]
  %s9 = sld [smem:[#allocation0]]
  $region81: #{tpu_custom_call.1} parent=0
    _
  %s11 = ssub.s32 1, %s9
  %s12 = scalar_select 0, %s11, %s9
  $region1: #{tpu_custom_call.1} parent=0
    #allocation2 [shape = 'u8[20480]{0}', space=vmem, size = 0x5000, scoped, tag = 'input window, operand 0']
    #allocation3 [shape = 's32[2]{0}', space=sflag, size = 0x8, scoped, tag = 'scoped memory for tpu_custom_call.1']
    #allocation4 [shape = 'u8[65536]{0}', space=vmem, size = 0x10000, scoped, tag = 'input window, operand 1, single buffered']
    #allocation5 [shape = 's32[1]{0}', space=sflag, size = 0x4, scoped, tag = 'scoped memory for tpu_custom_call.1']
    #allocation6 [shape = 'u8[294912]{0}', space=vmem, size = 0x48000, scoped, tag = 'input window, operand 4, single buffered']
    #allocation7 [shape = 'u8[32768]{0}', space=vmem, size = 0x8000, scoped, tag = 'input window, operand 6, single buffered']
    #allocation8 [shape = 's32[1]{0}', space=sflag, size = 0x4, scoped, tag = 'scoped memory for tpu_custom_call.1']
    %13 = vsyncpa [#allocation3], 0
    %s14 = scalar_lea.sflag [#allocation3], 1
    %15 = vsyncpa %s14, 0
    %16 = vsyncpa [#allocation5], 0
    %17 = vsyncpa [#allocation8], 0
    loop: start=0, step=1, limit=4
    $region2: #{tpu_custom_call.1} parent=1 // loop_pre_header
      _
    $region3: #{tpu_custom_call.1} parent=1 // loop_header
      %s19 = sphi 0, %s23
      %p20 = scmp.ge.s32.totalorder %s19, 4
      %s29 = sphi 0, %s31
      %s32 = sphi 0, %s29
      %s33 = sphi 0, %s32
      %s49 = sphi 0, %s33
      %s53 = sphi 0, %s53
      %s55 = sphi 0, %s53
      %s56 = sphi 0, %s55
      %s70 = sphi 0, %s56
      %s74 = sphi 0, %s74
      %s76 = sphi 0, %s74
      %s77 = sphi 0, %s76
      %s91 = sphi 0, %s77
      %s95 = sphi 0, %s95
      %s97 = sphi 0, %s95
      %s98 = sphi 0, %s97
      %s112 = sphi 0, %s98
      %s116 = sphi 0, %s116
      %s118 = sphi 0, %s116
      %s119 = sphi 0, %s118
      %s133 = sphi 0, %s119
      %s137 = sphi 0, %s137
      %s139 = sphi 0, %s137
      %s140 = sphi 0, %s139
      %s154 = sphi 0, %s140
      %s158 = sphi 0, %s158
      %s160 = sphi 0, %s158
      %s161 = sphi 0, %s160
      %s175 = sphi 0, %s161
      %s179 = sphi 0, %s179
      %s181 = sphi 0, %s179
      %s182 = sphi 0, %s181
      %s196 = sphi 0, %s182
      %s202 = sphi 0, %s204
      %s205 = sphi 0, %s202
      %s206 = sphi 0, %s205
      %s222 = sphi 0, %s206
    $region4: #{tpu_custom_call.1} parent=1 // loop_header_branch
      %22 = sbr.rel (%p20) target = $region8
    $region5: #{tpu_custom_call.1} parent=1 // loop_body
      %s24 = ssub.s32 %s19, 1
      %s25 = ssub.s32 %s19, 2
      %s26 = sadd.s32 %s19, 1
      %s27 = ssub.s32 %s19, %s26
      %p28 = scmp.eq.s32.totalorder %s27, 0
      %s30 = sadd.s32 %s29, 1
      %s31 = scalar_select %p28, %s29, %s30
      %p34 = pneg %p28
      %p35 = scmp.eq.s32.totalorder %s19, 1
      %p36 = por %p34, %p35
      %p37 = scmp.ne.s32.totalorder %s29, %s32
      %p38 = scmp.eq.s32.totalorder %s19, 0
      %p39 = por %p37, %p38
      %p40 = scmp.ne.s32.totalorder %s29, %s32
      %p41 = scmp.eq.s32.totalorder %s24, 1
      %p42 = por %p40, %p41
      %p43 = scmp.ne.s32.totalorder %s32, %s33
      %p44 = scmp.eq.s32.totalorder %s24, 0
      %p45 = por %p43, %p44
      %p46 = scmp.ne.s32.totalorder %s32, %s33
      %p47 = scmp.eq.s32.totalorder %s25, 1
      %p48 = por %p46, %p47
      %p50 = scmp.ne.s32.totalorder %s33, %s49
      %p51 = scmp.eq.s32.totalorder %s25, 0
      %p52 = por %p50, %p51
      %s54 = sadd.s32 %s53, 1
      %p57 = scmp.eq.s32.totalorder %s19, 1
      %p58 = scmp.ne.s32.totalorder %s53, %s55
      %p59 = scmp.eq.s32.totalorder %s19, 0
      %p60 = por %p58, %p59
      %p61 = scmp.ne.s32.totalorder %s53, %s55
      %p62 = scmp.eq.s32.totalorder %s24, 1
      %p63 = por %p61, %p62
      %p64 = scmp.ne.s32.totalorder %s55, %s56
      %p65 = scmp.eq.s32.totalorder %s24, 0
      %p66 = por %p64, %p65
      %p67 = scmp.ne.s32.totalorder %s55, %s56
      %p68 = scmp.eq.s32.totalorder %s25, 1
      %p69 = por %p67, %p68
      %p71 = scmp.ne.s32.totalorder %s56, %s70
      %p72 = scmp.eq.s32.totalorder %s25, 0
      %p73 = por %p71, %p72
      %s75 = sadd.s32 %s74, 1
      %p78 = scmp.eq.s32.totalorder %s19, 1
      %p79 = scmp.ne.s32.totalorder %s74, %s76
      %p80 = scmp.eq.s32.totalorder %s19, 0
      %p81 = por %p79, %p80
      %p82 = scmp.ne.s32.totalorder %s74, %s76
      %p83 = scmp.eq.s32.totalorder %s24, 1
      %p84 = por %p82, %p83
      %p85 = scmp.ne.s32.totalorder %s76, %s77
      %p86 = scmp.eq.s32.totalorder %s24, 0
      %p87 = por %p85, %p86
      %p88 = scmp.ne.s32.totalorder %s76, %s77
      %p89 = scmp.eq.s32.totalorder %s25, 1
      %p90 = por %p88, %p89
      %p92 = scmp.ne.s32.totalorder %s77, %s91
      %p93 = scmp.eq.s32.totalorder %s25, 0
      %p94 = por %p92, %p93
      %s96 = sadd.s32 %s95, 1
      %p99 = scmp.eq.s32.totalorder %s19, 1
      %p100 = scmp.ne.s32.totalorder %s95, %s97
      %p101 = scmp.eq.s32.totalorder %s19, 0
      %p102 = por %p100, %p101
      %p103 = scmp.ne.s32.totalorder %s95, %s97
      %p104 = scmp.eq.s32.totalorder %s24, 1
      %p105 = por %p103, %p104
      %p106 = scmp.ne.s32.totalorder %s97, %s98
      %p107 = scmp.eq.s32.totalorder %s24, 0
      %p108 = por %p106, %p107
      %p109 = scmp.ne.s32.totalorder %s97, %s98
      %p110 = scmp.eq.s32.totalorder %s25, 1
      %p111 = por %p109, %p110
      %p113 = scmp.ne.s32.totalorder %s98, %s112
      %p114 = scmp.eq.s32.totalorder %s25, 0
      %p115 = por %p113, %p114
      %s117 = sadd.s32 %s116, 1
      %p120 = scmp.eq.s32.totalorder %s19, 1
      %p121 = scmp.ne.s32.totalorder %s116, %s118
      %p122 = scmp.eq.s32.totalorder %s19, 0
      %p123 = por %p121, %p122
      %p124 = scmp.ne.s32.totalorder %s116, %s118
      %p125 = scmp.eq.s32.totalorder %s24, 1
      %p126 = por %p124, %p125
      %p127 = scmp.ne.s32.totalorder %s118, %s119
      %p128 = scmp.eq.s32.totalorder %s24, 0
      %p129 = por %p127, %p128
      %p130 = scmp.ne.s32.totalorder %s118, %s119
      %p131 = scmp.eq.s32.totalorder %s25, 1
      %p132 = por %p130, %p131
      %p134 = scmp.ne.s32.totalorder %s119, %s133
      %p135 = scmp.eq.s32.totalorder %s25, 0
      %p136 = por %p134, %p135
      %s138 = sadd.s32 %s137, 1
      %p141 = scmp.eq.s32.totalorder %s19, 1
      %p142 = scmp.ne.s32.totalorder %s137, %s139
      %p143 = scmp.eq.s32.totalorder %s19, 0
      %p144 = por %p142, %p143
      %p145 = scmp.ne.s32.totalorder %s137, %s139
      %p146 = scmp.eq.s32.totalorder %s24, 1
      %p147 = por %p145, %p146
      %p148 = scmp.ne.s32.totalorder %s139, %s140
      %p149 = scmp.eq.s32.totalorder %s24, 0
      %p150 = por %p148, %p149
      %p151 = scmp.ne.s32.totalorder %s139, %s140
      %p152 = scmp.eq.s32.totalorder %s25, 1
      %p153 = por %p151, %p152
      %p155 = scmp.ne.s32.totalorder %s140, %s154
      %p156 = scmp.eq.s32.totalorder %s25, 0
      %p157 = por %p155, %p156
      %s159 = sadd.s32 %s158, 1
      %p162 = scmp.eq.s32.totalorder %s19, 1
      %p163 = scmp.ne.s32.totalorder %s158, %s160
      %p164 = scmp.eq.s32.totalorder %s19, 0
      %p165 = por %p163, %p164
      %p166 = scmp.ne.s32.totalorder %s158, %s160
      %p167 = scmp.eq.s32.totalorder %s24, 1
      %p168 = por %p166, %p167
      %p169 = scmp.ne.s32.totalorder %s160, %s161
      %p170 = scmp.eq.s32.totalorder %s24, 0
      %p171 = por %p169, %p170
      %p172 = scmp.ne.s32.totalorder %s160, %s161
      %p173 = scmp.eq.s32.totalorder %s25, 1
      %p174 = por %p172, %p173
      %p176 = scmp.ne.s32.totalorder %s161, %s175
      %p177 = scmp.eq.s32.totalorder %s25, 0
      %p178 = por %p176, %p177
      %s180 = sadd.s32 %s179, 1
      %p183 = scmp.eq.s32.totalorder %s19, 1
      %p184 = scmp.ne.s32.totalorder %s179, %s181
      %p185 = scmp.eq.s32.totalorder %s19, 0
      %p186 = por %p184, %p185
      %p187 = scmp.ne.s32.totalorder %s179, %s181
      %p188 = scmp.eq.s32.totalorder %s24, 1
      %p189 = por %p187, %p188
      %p190 = scmp.ne.s32.totalorder %s181, %s182
      %p191 = scmp.eq.s32.totalorder %s24, 0
      %p192 = por %p190, %p191
      %p193 = scmp.ne.s32.totalorder %s181, %s182
      %p194 = scmp.eq.s32.totalorder %s25, 1
      %p195 = por %p193, %p194
      %p197 = scmp.ne.s32.totalorder %s182, %s196
      %p198 = scmp.eq.s32.totalorder %s25, 0
      %p199 = por %p197, %p198
      %s200 = ssub.s32 %s19, %s26
      %p201 = scmp.eq.s32.totalorder %s200, 0
      %s203 = sadd.s32 %s202, 1
      %s204 = scalar_select %p201, %s202, %s203
      %p207 = pneg %p201
      %p208 = scmp.eq.s32.totalorder %s19, 1
      %p209 = por %p207, %p208
      %p210 = scmp.ne.s32.totalorder %s202, %s205
      %p211 = scmp.eq.s32.totalorder %s19, 0
      %p212 = por %p210, %p211
      %p213 = scmp.ne.s32.totalorder %s202, %s205
      %p214 = scmp.eq.s32.totalorder %s24, 1
      %p215 = por %p213, %p214
      %p216 = scmp.ne.s32.totalorder %s205, %s206
      %p217 = scmp.eq.s32.totalorder %s24, 0
      %p218 = por %p216, %p217
      %p219 = scmp.ne.s32.totalorder %s205, %s206
      %p220 = scmp.eq.s32.totalorder %s25, 1
      %p221 = por %p219, %p220
      %p223 = scmp.ne.s32.totalorder %s206, %s222
      %p224 = scmp.eq.s32.totalorder %s25, 0
      %p225 = por %p223, %p224
      %p226 = scmp.le.s32.totalorder 1, %s19
      %p227 = scmp.lt.s32.totalorder %s19, 3
      %p228 = pnand %p226, %p227
      %p229 = pneg %p228
      // Predicated region
      $region9: #{tpu_custom_call.1} parent=5 // pred_check
        _
      $region10: #{tpu_custom_call.1} parent=5 // pred_check_branch
        %231 = sbr.rel (%p228) target = $region12
      $region11: #{tpu_custom_call.1} parent=5 // pred_region
        %s232 = ssub.s32 %s19, 1
        // Predicated region
        $region13: #{tpu_custom_call.1} parent=11 // pred_check
          %p233 = pneg %p66
        $region14: #{tpu_custom_call.1} parent=11 // pred_check_branch
          %235 = sbr.rel (%p233) target = $region16
        $region15: #{tpu_custom_call.1} parent=11 // pred_region
          %237 = vsyncadd [#allocation5], 0
          %s238 = sshll.u32 %s1, 4
          %s239 = int_to_ptr.hbm [resolvable:$true] %s238
          %s240 = sshll.u32 [#allocation4], 4
          %s241 = int_to_ptr.vmem [resolvable:$true] %s240
          %246 = dma.hbm_to_vmem [thread:$0]  %s239, 2048, %s241, [#allocation5], 128, 128, 8
        $region16: #{tpu_custom_call.1} parent=11 // pred_fallthru
          _
        // Predicated region
        $region17: #{tpu_custom_call.1} parent=11 // pred_check
          %p247 = pneg %p87
        $region18: #{tpu_custom_call.1} parent=11 // pred_check_branch
          %249 = sbr.rel (%p247) target = $region20
        $region19: #{tpu_custom_call.1} parent=11 // pred_region
          _
        $region20: #{tpu_custom_call.1} parent=11 // pred_fallthru
          _
        // Predicated region
        $region21: #{tpu_custom_call.1} parent=11 // pred_check
          %p250 = pneg %p108
        $region22: #{tpu_custom_call.1} parent=11 // pred_check_branch
          %252 = sbr.rel (%p250) target = $region24
        $region23: #{tpu_custom_call.1} parent=11 // pred_region
          _
        $region24: #{tpu_custom_call.1} parent=11 // pred_fallthru
          _
        // Predicated region
        $region25: #{tpu_custom_call.1} parent=11 // pred_check
          %p253 = pneg %p129
        $region26: #{tpu_custom_call.1} parent=11 // pred_check_branch
          %255 = sbr.rel (%p253) target = $region28
        $region27: #{tpu_custom_call.1} parent=11 // pred_region
          %257 = vsyncadd [#allocation5], 0
          %s258 = sshll.u32 %s4, 4
          %s259 = int_to_ptr.hbm [resolvable:$true] %s258
          %s260 = sshll.u32 [#allocation6], 4
          %s261 = int_to_ptr.vmem [resolvable:$true] %s260
          %266 = dma.hbm_to_vmem [thread:$0]  %s259, 9216, %s261, [#allocation5], 64, 64, 4
        $region28: #{tpu_custom_call.1} parent=11 // pred_fallthru
          _
        // Predicated region
        $region29: #{tpu_custom_call.1} parent=11 // pred_check
          %p267 = pneg %p150
        $region30: #{tpu_custom_call.1} parent=11 // pred_check_branch
          %269 = sbr.rel (%p267) target = $region32
        $region31: #{tpu_custom_call.1} parent=11 // pred_region
          _
        $region32: #{tpu_custom_call.1} parent=11 // pred_fallthru
          _
        // Predicated region
        $region33: #{tpu_custom_call.1} parent=11 // pred_check
          %p270 = pneg %p171
        $region34: #{tpu_custom_call.1} parent=11 // pred_check_branch
          %272 = sbr.rel (%p270) target = $region36
        $region35: #{tpu_custom_call.1} parent=11 // pred_region
          %274 = vsyncadd [#allocation8], 0
          %s275 = sshll.u32 %s6, 4
          %s276 = int_to_ptr.hbm [resolvable:$true] %s275
          %s277 = sshll.u32 [#allocation7], 4
          %s278 = int_to_ptr.vmem [resolvable:$true] %s277
          %283 = dma.hbm_to_vmem [thread:$0]  %s276, 1024, %s278, [#allocation8], 64, 64, 4
        $region36: #{tpu_custom_call.1} parent=11 // pred_fallthru
          _
        // Predicated region
        $region37: #{tpu_custom_call.1} parent=11 // pred_check
          %p284 = pneg %p192
        $region38: #{tpu_custom_call.1} parent=11 // pred_check_branch
          %286 = sbr.rel (%p284) target = $region40
        $region39: #{tpu_custom_call.1} parent=11 // pred_region
          _
        $region40: #{tpu_custom_call.1} parent=11 // pred_fallthru
          _
      $region12: #{tpu_custom_call.1} parent=5 // pred_fallthru
        _
      %p287 = scmp.lt.s32.totalorder %s19, 2
      // Predicated region
      $region41: #{tpu_custom_call.1} parent=5 // pred_check
        %p288 = pneg %p287
      $region42: #{tpu_custom_call.1} parent=5 // pred_check_branch
        %290 = sbr.rel (%p288) target = $region44
      $region43: #{tpu_custom_call.1} parent=5 // pred_region
        // Predicated region
        $region45: #{tpu_custom_call.1} parent=43 // pred_check
          %p291 = pneg %p39
        $region46: #{tpu_custom_call.1} parent=43 // pred_check_branch
          %293 = sbr.rel (%p291) target = $region48
        $region47: #{tpu_custom_call.1} parent=43 // pred_region
          %s294 = sand.u32 %s29, 1
          %s295 = scalar_lea.sflag [#allocation3], %s294
          %s296 = sand.u32 %s29, 1
          %s297 = smul.addr %s296, 20
          %s298 = scalar_lea.vmem [#allocation2], %s297
          %s299 = smul.u32 5, %s19
          %301 = vsyncadd %s295, 0
          %s302 = smul.addr %s299, 4
          %s303 = scalar_lea.hbm %s0, %s302
          %s304 = sshll.u32 %s303, 4
          %s305 = int_to_ptr.hbm [resolvable:$true] %s304
          %s306 = sshll.u32 %s298, 4
          %s307 = int_to_ptr.vmem [resolvable:$true] %s306
          %312 = dma.hbm_to_vmem [thread:$0]  %s305, 320, %s307, %s295, 64, 64, 4
        $region48: #{tpu_custom_call.1} parent=43 // pred_fallthru
          _
      $region44: #{tpu_custom_call.1} parent=5 // pred_fallthru
        _
      %p313 = scmp.le.s32.totalorder 1, %s19
      %p314 = scmp.lt.s32.totalorder %s19, 3
      %p315 = pnand %p313, %p314
      %p316 = pneg %p315
      // Predicated region
      $region49: #{tpu_custom_call.1} parent=5 // pred_check
        _
      $region50: #{tpu_custom_call.1} parent=5 // pred_check_branch
        %318 = sbr.rel (%p315) target = $region52
      $region51: #{tpu_custom_call.1} parent=5 // pred_region
        %s319 = ssub.s32 %s19, 1
        %s320 = sand.u32 %s32, 1
        %s321 = scalar_lea.sflag [#allocation3], %s320
        %s322 = sand.u32 %s32, 1
        %s323 = smul.addr %s322, 20
        %s324 = scalar_lea.vmem [#allocation2], %s323
        // Predicated region
        $region53: #{tpu_custom_call.1} parent=51 // pred_check
          %p325 = pneg %p45
        $region54: #{tpu_custom_call.1} parent=51 // pred_check_branch
          %327 = sbr.rel (%p325) target = $region56
        $region55: #{tpu_custom_call.1} parent=51 // pred_region
          %329 = dma.done %s321, 320
        $region56: #{tpu_custom_call.1} parent=51 // pred_fallthru
          _
        // Predicated region
        $region57: #{tpu_custom_call.1} parent=51 // pred_check
          %p330 = pneg %p66
        $region58: #{tpu_custom_call.1} parent=51 // pred_check_branch
          %332 = sbr.rel (%p330) target = $region60
        $region59: #{tpu_custom_call.1} parent=51 // pred_region
          %334 = dma.done [#allocation5], 2048
        $region60: #{tpu_custom_call.1} parent=51 // pred_fallthru
          _
        // Predicated region
        $region61: #{tpu_custom_call.1} parent=51 // pred_check
          %p335 = pneg %p129
        $region62: #{tpu_custom_call.1} parent=51 // pred_check_branch
          %337 = sbr.rel (%p335) target = $region64
        $region63: #{tpu_custom_call.1} parent=51 // pred_region
          %339 = dma.done [#allocation5], 9216
        $region64: #{tpu_custom_call.1} parent=51 // pred_fallthru
          _
        // Predicated region
        $region65: #{tpu_custom_call.1} parent=51 // pred_check
          %p340 = pneg %p171
        $region66: #{tpu_custom_call.1} parent=51 // pred_check_branch
          %342 = sbr.rel (%p340) target = $region68
        $region67: #{tpu_custom_call.1} parent=51 // pred_region
          %344 = dma.done [#allocation8], 1024
        $region68: #{tpu_custom_call.1} parent=51 // pred_fallthru
          _
        %s345 = sand.u32 %s32, 1
        %s346 = scalar_lea.sflag [#allocation3], %s345
        %s347 = sand.u32 %s32, 1
        %s348 = smul.addr %s347, 20
        %s349 = scalar_lea.vmem [#allocation2], %s348
        %p350 = pneg %p45
        %p351 = pneg %p42
        %p352 = pneg %p66
        %p353 = pneg %p63
        %p354 = pneg %p87
        %p355 = pneg %p84
        %p356 = pneg %p108
        %p357 = pneg %p105
        %p358 = pneg %p129
        %p359 = pneg %p126
        %p360 = pneg %p150
        %p361 = pneg %p147
        %p362 = pneg %p171
        %p363 = pneg %p168
        %p364 = pneg %p192
        %p365 = pneg %p189
        %p366 = pneg %p218
        %p367 = pneg %p215
        %p368 = scmp.lt.s32.totalorder %s24, 1
        %s369 = scalar_select %p368, %s24, 1
        %s370 = smul.addr %s369, 2
        %s371 = smul.addr %s370, 8
        %s372 = scalar_lea.vmem %s8, %s371
        %s373 = smul.u32 5, %s24
        %p374 = scmp.lt.s32.totalorder %s24, 1
        %s375 = scalar_select %p374, %s24, 1
        %s376 = smul.addr %s375, 2
        %s377 = smul.addr %s376, 8
        %s378 = scalar_lea.vmem %s8, %s377
        %v379 = vld [vmem:[%s324] sm:$0xf]
        %v380 = vld [vmem:[%s324 + $0x4] sm:$0xf]
        %v381 = vld [vmem:[%s324 + $0x8] sm:$0xf]
        %v382 = vld [vmem:[%s324 + $0xc] sm:$0xf]
        %v383 = vld [vmem:[%s324 + $0x10] sm:$0xf]
        %v384 = vld [vmem:[#allocation4] sm:$0xff]
        %v385 = vld [vmem:[#allocation4 + $0x8] sm:$0xff]
        %v386 = vld [vmem:[#allocation4 + $0x10] sm:$0xff]
        %v387 = vld [vmem:[#allocation4 + $0x18] sm:$0xff]
        %v388 = vld [vmem:[#allocation4 + $0x20] sm:$0xff]
        %v389 = vld [vmem:[#allocation4 + $0x28] sm:$0xff]
        %v390 = vld [vmem:[#allocation4 + $0x30] sm:$0xff]
        %v391 = vld [vmem:[#allocation4 + $0x38] sm:$0xff]
        %v392 = vld [vmem:[#allocation4 + $0x40] sm:$0xff]
        %v393 = vld [vmem:[#allocation4 + $0x48] sm:$0xff]
        %v394 = vld [vmem:[#allocation4 + $0x50] sm:$0xff]
        %v395 = vld [vmem:[#allocation4 + $0x58] sm:$0xff]
        %v396 = vld [vmem:[#allocation4 + $0x60] sm:$0xff]
        %v397 = vld [vmem:[#allocation4 + $0x68] sm:$0xff]
        %v398 = vld [vmem:[#allocation4 + $0x70] sm:$0xff]
        %v399 = vld [vmem:[#allocation4 + $0x78] sm:$0xff]
        %v405 = vunpack.c.l.b16 %v379
        %v406 = vunpack.c.l.b16 %v380
        %v407 = vunpack.c.l.b16 %v381
        %v408 = vunpack.c.l.b16 %v382
        %v409 = vunpack.c.l.b16 %v383
        %v410 = vpack.c.b16 %v406, %v405
        %v411 = vpack.c.b16 %v408, %v407
        %v412 = vpack.c.b16 %v409, %v409
        %v432 = vunpack.c.l.b16 %v384
        %v433 = vunpack.c.h.b16 %v384
        %v434 = vunpack.c.l.b16 %v385
        %v435 = vunpack.c.h.b16 %v385
        %v436 = vunpack.c.l.b16 %v386
        %v437 = vunpack.c.h.b16 %v386
        %v438 = vunpack.c.l.b16 %v387
        %v439 = vunpack.c.h.b16 %v387
        %v440 = vunpack.c.l.b16 %v388
        %v441 = vunpack.c.h.b16 %v388
        %v442 = vunpack.c.l.b16 %v389
        %v443 = vunpack.c.h.b16 %v389
        %v444 = vunpack.c.l.b16 %v390
        %v445 = vunpack.c.h.b16 %v390
        %v446 = vunpack.c.l.b16 %v391
        %v447 = vunpack.c.h.b16 %v391
        %v448 = vunpack.c.l.b16 %v392
        %v449 = vunpack.c.h.b16 %v392
        %v450 = vunpack.c.l.b16 %v393
        %v451 = vunpack.c.h.b16 %v393
        %v452 = vunpack.c.l.b16 %v394
        %v453 = vunpack.c.h.b16 %v394
        %v454 = vunpack.c.l.b16 %v395
        %v455 = vunpack.c.h.b16 %v395
        %v456 = vunpack.c.l.b16 %v396
        %v457 = vunpack.c.h.b16 %v396
        %v458 = vunpack.c.l.b16 %v397
        %v459 = vunpack.c.h.b16 %v397
        %v460 = vunpack.c.l.b16 %v398
        %v461 = vunpack.c.h.b16 %v398
        %v462 = vunpack.c.l.b16 %v399
        %v463 = vunpack.c.h.b16 %v399
        %v464 = vpack.c.b16 %v434, %v432
        %v465 = vpack.c.b16 %v435, %v433
        %v466 = vpack.c.b16 %v438, %v436
        %v467 = vpack.c.b16 %v439, %v437
        %v468 = vpack.c.b16 %v442, %v440
        %v469 = vpack.c.b16 %v443, %v441
        %v470 = vpack.c.b16 %v446, %v444
        %v471 = vpack.c.b16 %v447, %v445
        %v472 = vpack.c.b16 %v450, %v448
        %v473 = vpack.c.b16 %v451, %v449
        %v474 = vpack.c.b16 %v454, %v452
        %v475 = vpack.c.b16 %v455, %v453
        %v476 = vpack.c.b16 %v458, %v456
        %v477 = vpack.c.b16 %v459, %v457
        %v478 = vpack.c.b16 %v462, %v460
        %v479 = vpack.c.b16 %v463, %v461
        %496 = vmatpush.bf16.msra.mxu0 %v478
        %497 = vmatpush.bf16.msra.mxu0 %v476
        %498 = vmatpush.bf16.msra.mxu0 %v474
        %499 = vmatpush.bf16.msra.mxu0 %v472
        %500 = vmatpush.bf16.msra.mxu0 %v470
        %501 = vmatpush.bf16.msra.mxu0 %v468
        %502 = vmatpush.bf16.msra.mxu0 %v466
        %503 = vmatpush.bf16.msra.mxu0 %v464
        %504 = vmatmul.bf16.gmra.mxu0 %v410
        %v505 = vpop.f32.mrf.mxu0
        %v506 = vadd.f32 0.0, %v505
        %v507 = vpop.f32.mrf.mxu0
        %v508 = vadd.f32 0.0, %v507
        %509 = vmatmul.bf16.gmra.mxu0 %v411
        %v510 = vpop.f32.mrf.mxu0
        %v511 = vpop.f32.mrf.mxu0
        %512 = vmatmul.bf16.gmra.mxu0 %v412
        %v513 = vpop.f32.mrf.mxu0
        %v514 = vpop.f32.mrf.mxu0
        %515 = vdwg.mxu0
        %516 = vmatpush.bf16.msra.mxu0 %v479
        %517 = vmatpush.bf16.msra.mxu0 %v477
        %518 = vmatpush.bf16.msra.mxu0 %v475
        %519 = vmatpush.bf16.msra.mxu0 %v473
        %520 = vmatpush.bf16.msra.mxu0 %v471
        %521 = vmatpush.bf16.msra.mxu0 %v469
        %522 = vmatpush.bf16.msra.mxu0 %v467
        %523 = vmatpush.bf16.msra.mxu0 %v465
        %524 = vmatmul.bf16.gmra.mxu0 %v410
        %v525 = vpop.f32.mrf.mxu0
        %v526 = vadd.f32 0.0, %v525
        %v527 = vpop.f32.mrf.mxu0
        %v528 = vadd.f32 0.0, %v527
        %529 = vmatmul.bf16.gmra.mxu0 %v411
        %v530 = vpop.f32.mrf.mxu0
        %v531 = vadd.f32 0.0, %v530
        %v532 = vpop.f32.mrf.mxu0
        %v533 = vadd.f32 0.0, %v532
        %534 = vmatmul.bf16.gmra.mxu0 %v412
        %v535 = vpop.f32.mrf.mxu0
        %v536 = vpop.f32.mrf.mxu0
        %537 = vdwg.mxu0
        %v538 = vld [vmem:[%s2] sm:$0x1]
        %v540 = vperm.slane %v538, 0
        %v542 = vadd.f32 %v506, %v540
        %v543 = vadd.f32 %v508, %v540
        %v544 = vmax.f32 %v542, 0.0
        %v545 = vmax.f32 %v543, 0.0
        %v547 = vrot.slane %v526, 1
        %v549 = vrot.slane %v526, 2
        %v552 = vrot.slane %v528, 1
        %v554 = vrot.slane %v528, 2
        %v557 = vrot.slane %v531, 3
        %v560 = vrot.slane %v533, 2
        %v562 = vrot.slane %v533, 3
        %v564 = vrot.slane %v533, 4
        %vm566 = vcmask 1040384
        %v567 = vsel %vm566, %v526, %v547
        %vm568 = vcmask 1041408
        %v569 = vsel %vm568, %v567, %v549
        %vm570 = vcmask 1042432
        %v571 = vsel %vm570, %v569, %v552
        %vm572 = vcmask 1043456
        %v573 = vsel %vm572, %v571, %v554
        %vm574 = vcmask 1044480
        %v575 = vsel %vm574, %v573, %v557
        %vm576 = vcmask 1045504
        %v577 = vsel %vm576, %v575, %v560
        %vm578 = vcmask 1046528
        %v579 = vsel %vm578, %v577, %v562
        %v580 = vld [vmem:[%s3] sm:$0x1]
        %v582 = vperm.slane %v580, 0
        %v584 = vadd.f32 %v579, %v582
        %v585 = vadd.f32 %v564, %v582
        %v587 = vrot.slane %v544, 1
        %v589 = vrot.slane %v544, 2
        %v591 = vrot.slane %v544, 6
        %v593 = vrot.slane %v544, 7
        %v596 = vrot.slane %v545, 4
        %v598 = vrot.slane %v545, 5
        %v600 = vrot.slane %v545, 6
        %v602 = vpack.c.bf16 %v544, %v544
        %v603 = vpack.c.bf16 %v587, %v587
        %v604 = vpack.c.bf16 %v589, %v589
        %v605 = vpack.c.bf16 %v591, %v591
        %v606 = vpack.c.bf16 %v593, %v593
        %v607 = vpack.c.bf16 %v545, %v545
        %v608 = vpack.c.bf16 %v596, %v596
        %v609 = vpack.c.bf16 %v598, %v598
        %v610 = vpack.c.bf16 %v600, %v600
        %v611 = vld [vmem:[#allocation6] sm:$0xf]
        %v612 = vld [vmem:[#allocation6 + $0x4] sm:$0xf]
        %v613 = vld [vmem:[#allocation6 + $0x8] sm:$0xf]
        %v614 = vld [vmem:[#allocation6 + $0xc] sm:$0xf]
        %v615 = vld [vmem:[#allocation6 + $0x10] sm:$0xf]
        %v616 = vld [vmem:[#allocation6 + $0x14] sm:$0xf]
        %v617 = vld [vmem:[#allocation6 + $0x18] sm:$0xf]
        %v618 = vld [vmem:[#allocation6 + $0x1c] sm:$0xf]
        %v619 = vld [vmem:[#allocation6 + $0x20] sm:$0xf]
        %v620 = vld [vmem:[#allocation6 + $0x24] sm:$0xf]
        %v621 = vld [vmem:[#allocation6 + $0x28] sm:$0xf]
        %v622 = vld [vmem:[#allocation6 + $0x2c] sm:$0xf]
        %v623 = vld [vmem:[#allocation6 + $0x30] sm:$0xf]
        %v624 = vld [vmem:[#allocation6 + $0x34] sm:$0xf]
        %v625 = vld [vmem:[#allocation6 + $0x38] sm:$0xf]
        %v626 = vld [vmem:[#allocation6 + $0x3c] sm:$0xf]
        %v627 = vld [vmem:[#allocation6 + $0x40] sm:$0xf]
        %v628 = vld [vmem:[#allocation6 + $0x44] sm:$0xf]
        %v629 = vld [vmem:[#allocation6 + $0x48] sm:$0xf]
        %v630 = vld [vmem:[#allocation6 + $0x4c] sm:$0xf]
        %v631 = vld [vmem:[#allocation6 + $0x50] sm:$0xf]
        %v632 = vld [vmem:[#allocation6 + $0x54] sm:$0xf]
        %v633 = vld [vmem:[#allocation6 + $0x58] sm:$0xf]
        %v634 = vld [vmem:[#allocation6 + $0x5c] sm:$0xf]
        %v635 = vld [vmem:[#allocation6 + $0x60] sm:$0xf]
        %v636 = vld [vmem:[#allocation6 + $0x64] sm:$0xf]
        %v637 = vld [vmem:[#allocation6 + $0x68] sm:$0xf]
        %v638 = vld [vmem:[#allocation6 + $0x6c] sm:$0xf]
        %v639 = vld [vmem:[#allocation6 + $0x70] sm:$0xf]
        %v640 = vld [vmem:[#allocation6 + $0x74] sm:$0xf]
        %v641 = vld [vmem:[#allocation6 + $0x78] sm:$0xf]
        %v642 = vld [vmem:[#allocation6 + $0x7c] sm:$0xf]
        %v643 = vld [vmem:[#allocation6 + $0x80] sm:$0xf]
        %v644 = vld [vmem:[#allocation6 + $0x84] sm:$0xf]
        %v645 = vld [vmem:[#allocation6 + $0x88] sm:$0xf]
        %v646 = vld [vmem:[#allocation6 + $0x8c] sm:$0xf]
        %v647 = vld [vmem:[#allocation6 + $0x90] sm:$0xf]
        %v648 = vld [vmem:[#allocation6 + $0x94] sm:$0xf]
        %v649 = vld [vmem:[#allocation6 + $0x98] sm:$0xf]
        %v650 = vld [vmem:[#allocation6 + $0x9c] sm:$0xf]
        %v651 = vld [vmem:[#allocation6 + $0xa0] sm:$0xf]
        %v652 = vld [vmem:[#allocation6 + $0xa4] sm:$0xf]
        %v653 = vld [vmem:[#allocation6 + $0xa8] sm:$0xf]
        %v654 = vld [vmem:[#allocation6 + $0xac] sm:$0xf]
        %v655 = vld [vmem:[#allocation6 + $0xb0] sm:$0xf]
        %v656 = vld [vmem:[#allocation6 + $0xb4] sm:$0xf]
        %v657 = vld [vmem:[#allocation6 + $0xb8] sm:$0xf]
        %v658 = vld [vmem:[#allocation6 + $0xbc] sm:$0xf]
        %v659 = vld [vmem:[#allocation6 + $0xc0] sm:$0xf]
        %v660 = vld [vmem:[#allocation6 + $0xc4] sm:$0xf]
        %v661 = vld [vmem:[#allocation6 + $0xc8] sm:$0xf]
        %v662 = vld [vmem:[#allocation6 + $0xcc] sm:$0xf]
        %v663 = vld [vmem:[#allocation6 + $0xd0] sm:$0xf]
        %v664 = vld [vmem:[#allocation6 + $0xd4] sm:$0xf]
        %v665 = vld [vmem:[#allocation6 + $0xd8] sm:$0xf]
        %v666 = vld [vmem:[#allocation6 + $0xdc] sm:$0xf]
        %v667 = vld [vmem:[#allocation6 + $0xe0] sm:$0xf]
        %v668 = vld [vmem:[#allocation6 + $0xe4] sm:$0xf]
        %v669 = vld [vmem:[#allocation6 + $0xe8] sm:$0xf]
        %v670 = vld [vmem:[#allocation6 + $0xec] sm:$0xf]
        %v671 = vld [vmem:[#allocation6 + $0xf0] sm:$0xf]
        %v672 = vld [vmem:[#allocation6 + $0xf4] sm:$0xf]
        %v673 = vld [vmem:[#allocation6 + $0xf8] sm:$0xf]
        %v674 = vld [vmem:[#allocation6 + $0xfc] sm:$0xf]
        %v675 = vld [vmem:[#allocation6 + $0x100] sm:$0xf]
        %v676 = vld [vmem:[#allocation6 + $0x104] sm:$0xf]
        %v677 = vld [vmem:[#allocation6 + $0x108] sm:$0xf]
        %v678 = vld [vmem:[#allocation6 + $0x10c] sm:$0xf]
        %v679 = vld [vmem:[#allocation6 + $0x110] sm:$0xf]
        %v680 = vld [vmem:[#allocation6 + $0x114] sm:$0xf]
        %v681 = vld [vmem:[#allocation6 + $0x118] sm:$0xf]
        %v682 = vld [vmem:[#allocation6 + $0x11c] sm:$0xf]
        %v683 = vld [vmem:[#allocation6 + $0x120] sm:$0xf]
        %v684 = vld [vmem:[#allocation6 + $0x124] sm:$0xf]
        %v685 = vld [vmem:[#allocation6 + $0x128] sm:$0xf]
        %v686 = vld [vmem:[#allocation6 + $0x12c] sm:$0xf]
        %v687 = vld [vmem:[#allocation6 + $0x130] sm:$0xf]
        %v688 = vld [vmem:[#allocation6 + $0x134] sm:$0xf]
        %v689 = vld [vmem:[#allocation6 + $0x138] sm:$0xf]
        %v690 = vld [vmem:[#allocation6 + $0x13c] sm:$0xf]
        %v691 = vld [vmem:[#allocation6 + $0x140] sm:$0xf]
        %v692 = vld [vmem:[#allocation6 + $0x144] sm:$0xf]
        %v693 = vld [vmem:[#allocation6 + $0x148] sm:$0xf]
        %v694 = vld [vmem:[#allocation6 + $0x14c] sm:$0xf]
        %v695 = vld [vmem:[#allocation6 + $0x150] sm:$0xf]
        %v696 = vld [vmem:[#allocation6 + $0x154] sm:$0xf]
        %v697 = vld [vmem:[#allocation6 + $0x158] sm:$0xf]
        %v698 = vld [vmem:[#allocation6 + $0x15c] sm:$0xf]
        %v699 = vld [vmem:[#allocation6 + $0x160] sm:$0xf]
        %v700 = vld [vmem:[#allocation6 + $0x164] sm:$0xf]
        %v701 = vld [vmem:[#allocation6 + $0x168] sm:$0xf]
        %v702 = vld [vmem:[#allocation6 + $0x16c] sm:$0xf]
        %v703 = vld [vmem:[#allocation6 + $0x170] sm:$0xf]
        %v704 = vld [vmem:[#allocation6 + $0x174] sm:$0xf]
        %v705 = vld [vmem:[#allocation6 + $0x178] sm:$0xf]
        %v706 = vld [vmem:[#allocation6 + $0x17c] sm:$0xf]
        %v707 = vld [vmem:[#allocation6 + $0x180] sm:$0xf]
        %v708 = vld [vmem:[#allocation6 + $0x184] sm:$0xf]
        %v709 = vld [vmem:[#allocation6 + $0x188] sm:$0xf]
        %v710 = vld [vmem:[#allocation6 + $0x18c] sm:$0xf]
        %v711 = vld [vmem:[#allocation6 + $0x190] sm:$0xf]
        %v712 = vld [vmem:[#allocation6 + $0x194] sm:$0xf]
        %v713 = vld [vmem:[#allocation6 + $0x198] sm:$0xf]
        %v714 = vld [vmem:[#allocation6 + $0x19c] sm:$0xf]
        %v715 = vld [vmem:[#allocation6 + $0x1a0] sm:$0xf]
        %v716 = vld [vmem:[#allocation6 + $0x1a4] sm:$0xf]
        %v717 = vld [vmem:[#allocation6 + $0x1a8] sm:$0xf]
        %v718 = vld [vmem:[#allocation6 + $0x1ac] sm:$0xf]
        %v719 = vld [vmem:[#allocation6 + $0x1b0] sm:$0xf]
        %v720 = vld [vmem:[#allocation6 + $0x1b4] sm:$0xf]
        %v721 = vld [vmem:[#allocation6 + $0x1b8] sm:$0xf]
        %v722 = vld [vmem:[#allocation6 + $0x1bc] sm:$0xf]
        %v723 = vld [vmem:[#allocation6 + $0x1c0] sm:$0xf]
        %v724 = vld [vmem:[#allocation6 + $0x1c4] sm:$0xf]
        %v725 = vld [vmem:[#allocation6 + $0x1c8] sm:$0xf]
        %v726 = vld [vmem:[#allocation6 + $0x1cc] sm:$0xf]
        %v727 = vld [vmem:[#allocation6 + $0x1d0] sm:$0xf]
        %v728 = vld [vmem:[#allocation6 + $0x1d4] sm:$0xf]
        %v729 = vld [vmem:[#allocation6 + $0x1d8] sm:$0xf]
        %v730 = vld [vmem:[#allocation6 + $0x1dc] sm:$0xf]
        %v731 = vld [vmem:[#allocation6 + $0x1e0] sm:$0xf]
        %v732 = vld [vmem:[#allocation6 + $0x1e4] sm:$0xf]
        %v733 = vld [vmem:[#allocation6 + $0x1e8] sm:$0xf]
        %v734 = vld [vmem:[#allocation6 + $0x1ec] sm:$0xf]
        %v735 = vld [vmem:[#allocation6 + $0x1f0] sm:$0xf]
        %v736 = vld [vmem:[#allocation6 + $0x1f4] sm:$0xf]
        %v737 = vld [vmem:[#allocation6 + $0x1f8] sm:$0xf]
        %v738 = vld [vmem:[#allocation6 + $0x1fc] sm:$0xf]
        %v739 = vld [vmem:[#allocation6 + $0x200] sm:$0xf]
        %v740 = vld [vmem:[#allocation6 + $0x204] sm:$0xf]
        %v741 = vld [vmem:[#allocation6 + $0x208] sm:$0xf]
        %v742 = vld [vmem:[#allocation6 + $0x20c] sm:$0xf]
        %v743 = vld [vmem:[#allocation6 + $0x210] sm:$0xf]
        %v744 = vld [vmem:[#allocation6 + $0x214] sm:$0xf]
        %v745 = vld [vmem:[#allocation6 + $0x218] sm:$0xf]
        %v746 = vld [vmem:[#allocation6 + $0x21c] sm:$0xf]
        %v747 = vld [vmem:[#allocation6 + $0x220] sm:$0xf]
        %v748 = vld [vmem:[#allocation6 + $0x224] sm:$0xf]
        %v749 = vld [vmem:[#allocation6 + $0x228] sm:$0xf]
        %v750 = vld [vmem:[#allocation6 + $0x22c] sm:$0xf]
        %v751 = vld [vmem:[#allocation6 + $0x230] sm:$0xf]
        %v752 = vld [vmem:[#allocation6 + $0x234] sm:$0xf]
        %v753 = vld [vmem:[#allocation6 + $0x238] sm:$0xf]
        %v754 = vld [vmem:[#allocation6 + $0x23c] sm:$0xf]
        %v755 = vld [vmem:[%s5] sm:$0x1]
        %v900 = vunpack.c.l.b16 %v611
        %v901 = vunpack.c.l.b16 %v612
        %v902 = vunpack.c.l.b16 %v613
        %v903 = vunpack.c.l.b16 %v614
        %v904 = vunpack.c.l.b16 %v615
        %v905 = vunpack.c.l.b16 %v616
        %v906 = vunpack.c.l.b16 %v617
        %v907 = vunpack.c.l.b16 %v618
        %v908 = vunpack.c.l.b16 %v619
        %v909 = vunpack.c.l.b16 %v620
        %v910 = vunpack.c.l.b16 %v621
        %v911 = vunpack.c.l.b16 %v622
        %v912 = vunpack.c.l.b16 %v623
        %v913 = vunpack.c.l.b16 %v624
        %v914 = vunpack.c.l.b16 %v625
        %v915 = vunpack.c.l.b16 %v626
        %v916 = vunpack.c.l.b16 %v627
        %v917 = vunpack.c.l.b16 %v628
        %v918 = vunpack.c.l.b16 %v629
        %v919 = vunpack.c.l.b16 %v630
        %v920 = vunpack.c.l.b16 %v631
        %v921 = vunpack.c.l.b16 %v632
        %v922 = vunpack.c.l.b16 %v633
        %v923 = vunpack.c.l.b16 %v634
        %v924 = vunpack.c.l.b16 %v635
        %v925 = vunpack.c.l.b16 %v636
        %v926 = vunpack.c.l.b16 %v637
        %v927 = vunpack.c.l.b16 %v638
        %v928 = vunpack.c.l.b16 %v639
        %v929 = vunpack.c.l.b16 %v640
        %v930 = vunpack.c.l.b16 %v641
        %v931 = vunpack.c.l.b16 %v642
        %v932 = vunpack.c.l.b16 %v643
        %v933 = vunpack.c.l.b16 %v644
        %v934 = vunpack.c.l.b16 %v645
        %v935 = vunpack.c.l.b16 %v646
        %v936 = vunpack.c.l.b16 %v647
        %v937 = vunpack.c.l.b16 %v648
        %v938 = vunpack.c.l.b16 %v649
        %v939 = vunpack.c.l.b16 %v650
        %v940 = vunpack.c.l.b16 %v651
        %v941 = vunpack.c.l.b16 %v652
        %v942 = vunpack.c.l.b16 %v653
        %v943 = vunpack.c.l.b16 %v654
        %v944 = vunpack.c.l.b16 %v655
        %v945 = vunpack.c.l.b16 %v656
        %v946 = vunpack.c.l.b16 %v657
        %v947 = vunpack.c.l.b16 %v658
        %v948 = vunpack.c.l.b16 %v659
        %v949 = vunpack.c.l.b16 %v660
        %v950 = vunpack.c.l.b16 %v661
        %v951 = vunpack.c.l.b16 %v662
        %v952 = vunpack.c.l.b16 %v663
        %v953 = vunpack.c.l.b16 %v664
        %v954 = vunpack.c.l.b16 %v665
        %v955 = vunpack.c.l.b16 %v666
        %v956 = vunpack.c.l.b16 %v667
        %v957 = vunpack.c.l.b16 %v668
        %v958 = vunpack.c.l.b16 %v669
        %v959 = vunpack.c.l.b16 %v670
        %v960 = vunpack.c.l.b16 %v671
        %v961 = vunpack.c.l.b16 %v672
        %v962 = vunpack.c.l.b16 %v673
        %v963 = vunpack.c.l.b16 %v674
        %v964 = vunpack.c.l.b16 %v675
        %v965 = vunpack.c.l.b16 %v676
        %v966 = vunpack.c.l.b16 %v677
        %v967 = vunpack.c.l.b16 %v678
        %v968 = vunpack.c.l.b16 %v679
        %v969 = vunpack.c.l.b16 %v680
        %v970 = vunpack.c.l.b16 %v681
        %v971 = vunpack.c.l.b16 %v682
        %v972 = vunpack.c.l.b16 %v683
        %v973 = vunpack.c.l.b16 %v684
        %v974 = vunpack.c.l.b16 %v685
        %v975 = vunpack.c.l.b16 %v686
        %v976 = vunpack.c.l.b16 %v687
        %v977 = vunpack.c.l.b16 %v688
        %v978 = vunpack.c.l.b16 %v689
        %v979 = vunpack.c.l.b16 %v690
        %v980 = vunpack.c.l.b16 %v691
        %v981 = vunpack.c.l.b16 %v692
        %v982 = vunpack.c.l.b16 %v693
        %v983 = vunpack.c.l.b16 %v694
        %v984 = vunpack.c.l.b16 %v695
        %v985 = vunpack.c.l.b16 %v696
        %v986 = vunpack.c.l.b16 %v697
        %v987 = vunpack.c.l.b16 %v698
        %v988 = vunpack.c.l.b16 %v699
        %v989 = vunpack.c.l.b16 %v700
        %v990 = vunpack.c.l.b16 %v701
        %v991 = vunpack.c.l.b16 %v702
        %v992 = vunpack.c.l.b16 %v703
        %v993 = vunpack.c.l.b16 %v704
        %v994 = vunpack.c.l.b16 %v705
        %v995 = vunpack.c.l.b16 %v706
        %v996 = vunpack.c.l.b16 %v707
        %v997 = vunpack.c.l.b16 %v708
        %v998 = vunpack.c.l.b16 %v709
        %v999 = vunpack.c.l.b16 %v710
        %v1000 = vunpack.c.l.b16 %v711
        %v1001 = vunpack.c.l.b16 %v712
        %v1002 = vunpack.c.l.b16 %v713
        %v1003 = vunpack.c.l.b16 %v714
        %v1004 = vunpack.c.l.b16 %v715
        %v1005 = vunpack.c.l.b16 %v716
        %v1006 = vunpack.c.l.b16 %v717
        %v1007 = vunpack.c.l.b16 %v718
        %v1008 = vunpack.c.l.b16 %v719
        %v1009 = vunpack.c.l.b16 %v720
        %v1010 = vunpack.c.l.b16 %v721
        %v1011 = vunpack.c.l.b16 %v722
        %v1012 = vunpack.c.l.b16 %v723
        %v1013 = vunpack.c.l.b16 %v724
        %v1014 = vunpack.c.l.b16 %v725
        %v1015 = vunpack.c.l.b16 %v726
        %v1016 = vunpack.c.l.b16 %v727
        %v1017 = vunpack.c.l.b16 %v728
        %v1018 = vunpack.c.l.b16 %v729
        %v1019 = vunpack.c.l.b16 %v730
        %v1020 = vunpack.c.l.b16 %v731
        %v1021 = vunpack.c.l.b16 %v732
        %v1022 = vunpack.c.l.b16 %v733
        %v1023 = vunpack.c.l.b16 %v734
        %v1024 = vunpack.c.l.b16 %v735
        %v1025 = vunpack.c.l.b16 %v736
        %v1026 = vunpack.c.l.b16 %v737
        %v1027 = vunpack.c.l.b16 %v738
        %v1028 = vunpack.c.l.b16 %v739
        %v1029 = vunpack.c.l.b16 %v740
        %v1030 = vunpack.c.l.b16 %v741
        %v1031 = vunpack.c.l.b16 %v742
        %v1032 = vunpack.c.l.b16 %v743
        %v1033 = vunpack.c.l.b16 %v744
        %v1034 = vunpack.c.l.b16 %v745
        %v1035 = vunpack.c.l.b16 %v746
        %v1036 = vunpack.c.l.b16 %v747
        %v1037 = vunpack.c.l.b16 %v748
        %v1038 = vunpack.c.l.b16 %v749
        %v1039 = vunpack.c.l.b16 %v750
        %v1040 = vunpack.c.l.b16 %v751
        %v1041 = vunpack.c.l.b16 %v752
        %v1042 = vunpack.c.l.b16 %v753
        %v1043 = vunpack.c.l.b16 %v754
        %v1044 = vpack.c.b16 %v901, %v900
        %v1045 = vpack.c.b16 %v903, %v902
        %v1046 = vpack.c.b16 %v905, %v904
        %v1047 = vpack.c.b16 %v907, %v906
        %v1048 = vpack.c.b16 %v909, %v908
        %v1049 = vpack.c.b16 %v911, %v910
        %v1050 = vpack.c.b16 %v913, %v912
        %v1051 = vpack.c.b16 %v915, %v914
        %v1052 = vpack.c.b16 %v917, %v916
        %v1053 = vpack.c.b16 %v919, %v918
        %v1054 = vpack.c.b16 %v921, %v920
        %v1055 = vpack.c.b16 %v923, %v922
        %v1056 = vpack.c.b16 %v925, %v924
        %v1057 = vpack.c.b16 %v927, %v926
        %v1058 = vpack.c.b16 %v929, %v928
        %v1059 = vpack.c.b16 %v931, %v930
        %v1060 = vpack.c.b16 %v933, %v932
        %v1061 = vpack.c.b16 %v935, %v934
        %v1062 = vpack.c.b16 %v937, %v936
        %v1063 = vpack.c.b16 %v939, %v938
        %v1064 = vpack.c.b16 %v941, %v940
        %v1065 = vpack.c.b16 %v943, %v942
        %v1066 = vpack.c.b16 %v945, %v944
        %v1067 = vpack.c.b16 %v947, %v946
        %v1068 = vpack.c.b16 %v949, %v948
        %v1069 = vpack.c.b16 %v951, %v950
        %v1070 = vpack.c.b16 %v953, %v952
        %v1071 = vpack.c.b16 %v955, %v954
        %v1072 = vpack.c.b16 %v957, %v956
        %v1073 = vpack.c.b16 %v959, %v958
        %v1074 = vpack.c.b16 %v961, %v960
        %v1075 = vpack.c.b16 %v963, %v962
        %v1076 = vpack.c.b16 %v965, %v964
        %v1077 = vpack.c.b16 %v967, %v966
        %v1078 = vpack.c.b16 %v969, %v968
        %v1079 = vpack.c.b16 %v971, %v970
        %v1080 = vpack.c.b16 %v973, %v972
        %v1081 = vpack.c.b16 %v975, %v974
        %v1082 = vpack.c.b16 %v977, %v976
        %v1083 = vpack.c.b16 %v979, %v978
        %v1084 = vpack.c.b16 %v981, %v980
        %v1085 = vpack.c.b16 %v983, %v982
        %v1086 = vpack.c.b16 %v985, %v984
        %v1087 = vpack.c.b16 %v987, %v986
        %v1088 = vpack.c.b16 %v989, %v988
        %v1089 = vpack.c.b16 %v991, %v990
        %v1090 = vpack.c.b16 %v993, %v992
        %v1091 = vpack.c.b16 %v995, %v994
        %v1092 = vpack.c.b16 %v997, %v996
        %v1093 = vpack.c.b16 %v999, %v998
        %v1094 = vpack.c.b16 %v1001, %v1000
        %v1095 = vpack.c.b16 %v1003, %v1002
        %v1096 = vpack.c.b16 %v1005, %v1004
        %v1097 = vpack.c.b16 %v1007, %v1006
        %v1098 = vpack.c.b16 %v1009, %v1008
        %v1099 = vpack.c.b16 %v1011, %v1010
        %v1100 = vpack.c.b16 %v1013, %v1012
        %v1101 = vpack.c.b16 %v1015, %v1014
        %v1102 = vpack.c.b16 %v1017, %v1016
        %v1103 = vpack.c.b16 %v1019, %v1018
        %v1104 = vpack.c.b16 %v1021, %v1020
        %v1105 = vpack.c.b16 %v1023, %v1022
        %v1106 = vpack.c.b16 %v1025, %v1024
        %v1107 = vpack.c.b16 %v1027, %v1026
        %v1108 = vpack.c.b16 %v1029, %v1028
        %v1109 = vpack.c.b16 %v1031, %v1030
        %v1110 = vpack.c.b16 %v1033, %v1032
        %v1111 = vpack.c.b16 %v1035, %v1034
        %v1112 = vpack.c.b16 %v1037, %v1036
        %v1113 = vpack.c.b16 %v1039, %v1038
        %v1114 = vpack.c.b16 %v1041, %v1040
        %v1115 = vpack.c.b16 %v1043, %v1042
        %1188 = vmatpush.bf16.msra.mxu0 %v1051
        %1189 = vmatpush.bf16.msra.mxu0 %v1050
        %1190 = vmatpush.bf16.msra.mxu0 %v1049
        %1191 = vmatpush.bf16.msra.mxu0 %v1048
        %1192 = vmatpush.bf16.msra.mxu0 %v1047
        %1193 = vmatpush.bf16.msra.mxu0 %v1046
        %1194 = vmatpush.bf16.msra.mxu0 %v1045
        %1195 = vmatpush.bf16.msra.mxu0 %v1044
        %1196 = vmatmul.bf16.gmra.mxu0 %v602
        %v1197 = vpop.f32.mrf.mxu0
        %v1198 = vadd.f32 %v755, %v1197
        %v1199 = vpop.f32.mrf.mxu0
        %1200 = vdwg.mxu0
        %1201 = vmatpush.bf16.msra.mxu0 %v1059
        %1202 = vmatpush.bf16.msra.mxu0 %v1058
        %1203 = vmatpush.bf16.msra.mxu0 %v1057
        %1204 = vmatpush.bf16.msra.mxu0 %v1056
        %1205 = vmatpush.bf16.msra.mxu0 %v1055
        %1206 = vmatpush.bf16.msra.mxu0 %v1054
        %1207 = vmatpush.bf16.msra.mxu0 %v1053
        %1208 = vmatpush.bf16.msra.mxu0 %v1052
        %1209 = vmatmul.bf16.gmra.mxu0 %v603
        %v1210 = vpop.f32.mrf.mxu0
        %v1211 = vadd.f32 %v1198, %v1210
        %v1212 = vpop.f32.mrf.mxu0
        %1213 = vdwg.mxu0
        %1214 = vmatpush.bf16.msra.mxu0 %v1067
        %1215 = vmatpush.bf16.msra.mxu0 %v1066
        %1216 = vmatpush.bf16.msra.mxu0 %v1065
        %1217 = vmatpush.bf16.msra.mxu0 %v1064
        %1218 = vmatpush.bf16.msra.mxu0 %v1063
        %1219 = vmatpush.bf16.msra.mxu0 %v1062
        %1220 = vmatpush.bf16.msra.mxu0 %v1061
        %1221 = vmatpush.bf16.msra.mxu0 %v1060
        %1222 = vmatmul.bf16.gmra.mxu0 %v604
        %v1223 = vpop.f32.mrf.mxu0
        %v1224 = vadd.f32 %v1211, %v1223
        %v1225 = vpop.f32.mrf.mxu0
        %1226 = vdwg.mxu0
        %1227 = vmatpush.bf16.msra.mxu0 %v1075
        %1228 = vmatpush.bf16.msra.mxu0 %v1074
        %1229 = vmatpush.bf16.msra.mxu0 %v1073
        %1230 = vmatpush.bf16.msra.mxu0 %v1072
        %1231 = vmatpush.bf16.msra.mxu0 %v1071
        %1232 = vmatpush.bf16.msra.mxu0 %v1070
        %1233 = vmatpush.bf16.msra.mxu0 %v1069
        %1234 = vmatpush.bf16.msra.mxu0 %v1068
        %1235 = vmatmul.bf16.gmra.mxu0 %v605
        %v1236 = vpop.f32.mrf.mxu0
        %v1237 = vadd.f32 %v1224, %v1236
        %v1238 = vpop.f32.mrf.mxu0
        %1239 = vdwg.mxu0
        %1240 = vmatpush.bf16.msra.mxu0 %v1083
        %1241 = vmatpush.bf16.msra.mxu0 %v1082
        %1242 = vmatpush.bf16.msra.mxu0 %v1081
        %1243 = vmatpush.bf16.msra.mxu0 %v1080
        %1244 = vmatpush.bf16.msra.mxu0 %v1079
        %1245 = vmatpush.bf16.msra.mxu0 %v1078
        %1246 = vmatpush.bf16.msra.mxu0 %v1077
        %1247 = vmatpush.bf16.msra.mxu0 %v1076
        %1248 = vmatmul.bf16.gmra.mxu0 %v606
        %v1249 = vpop.f32.mrf.mxu0
        %v1250 = vadd.f32 %v1237, %v1249
        %v1251 = vpop.f32.mrf.mxu0
        %1252 = vdwg.mxu0
        %1253 = vmatpush.bf16.msra.mxu0 %v1091
        %1254 = vmatpush.bf16.msra.mxu0 %v1090
        %1255 = vmatpush.bf16.msra.mxu0 %v1089
        %1256 = vmatpush.bf16.msra.mxu0 %v1088
        %1257 = vmatpush.bf16.msra.mxu0 %v1087
        %1258 = vmatpush.bf16.msra.mxu0 %v1086
        %1259 = vmatpush.bf16.msra.mxu0 %v1085
        %1260 = vmatpush.bf16.msra.mxu0 %v1084
        %1261 = vmatmul.bf16.gmra.mxu0 %v607
        %v1262 = vpop.f32.mrf.mxu0
        %v1263 = vadd.f32 %v1250, %v1262
        %v1264 = vpop.f32.mrf.mxu0
        %1265 = vdwg.mxu0
        %1266 = vmatpush.bf16.msra.mxu0 %v1099
        %1267 = vmatpush.bf16.msra.mxu0 %v1098
        %1268 = vmatpush.bf16.msra.mxu0 %v1097
        %1269 = vmatpush.bf16.msra.mxu0 %v1096
        %1270 = vmatpush.bf16.msra.mxu0 %v1095
        %1271 = vmatpush.bf16.msra.mxu0 %v1094
        %1272 = vmatpush.bf16.msra.mxu0 %v1093
        %1273 = vmatpush.bf16.msra.mxu0 %v1092
        %1274 = vmatmul.bf16.gmra.mxu0 %v608
        %v1275 = vpop.f32.mrf.mxu0
        %v1276 = vadd.f32 %v1263, %v1275
        %v1277 = vpop.f32.mrf.mxu0
        %1278 = vdwg.mxu0
        %1279 = vmatpush.bf16.msra.mxu0 %v1107
        %1280 = vmatpush.bf16.msra.mxu0 %v1106
        %1281 = vmatpush.bf16.msra.mxu0 %v1105
        %1282 = vmatpush.bf16.msra.mxu0 %v1104
        %1283 = vmatpush.bf16.msra.mxu0 %v1103
        %1284 = vmatpush.bf16.msra.mxu0 %v1102
        %1285 = vmatpush.bf16.msra.mxu0 %v1101
        %1286 = vmatpush.bf16.msra.mxu0 %v1100
        %1287 = vmatmul.bf16.gmra.mxu0 %v609
        %v1288 = vpop.f32.mrf.mxu0
        %v1289 = vadd.f32 %v1276, %v1288
        %v1290 = vpop.f32.mrf.mxu0
        %1291 = vdwg.mxu0
        %1292 = vmatpush.bf16.msra.mxu0 %v1115
        %1293 = vmatpush.bf16.msra.mxu0 %v1114
        %1294 = vmatpush.bf16.msra.mxu0 %v1113
        %1295 = vmatpush.bf16.msra.mxu0 %v1112
        %1296 = vmatpush.bf16.msra.mxu0 %v1111
        %1297 = vmatpush.bf16.msra.mxu0 %v1110
        %1298 = vmatpush.bf16.msra.mxu0 %v1109
        %1299 = vmatpush.bf16.msra.mxu0 %v1108
        %1300 = vmatmul.bf16.gmra.mxu0 %v610
        %v1301 = vpop.f32.mrf.mxu0
        %v1302 = vadd.f32 %v1289, %v1301
        %v1303 = vpop.f32.mrf.mxu0
        %1304 = vdwg.mxu0
        %v1305 = vmax.f32 %v1302, 0.0
        %v1306 = vpack.c.bf16 %v1305, %v1305
        %v1307 = vld [vmem:[#allocation7] sm:$0xf]
        %v1308 = vld [vmem:[#allocation7 + $0x4] sm:$0xf]
        %v1309 = vld [vmem:[#allocation7 + $0x8] sm:$0xf]
        %v1310 = vld [vmem:[#allocation7 + $0xc] sm:$0xf]
        %v1311 = vld [vmem:[#allocation7 + $0x10] sm:$0xf]
        %v1312 = vld [vmem:[#allocation7 + $0x14] sm:$0xf]
        %v1313 = vld [vmem:[#allocation7 + $0x18] sm:$0xf]
        %v1314 = vld [vmem:[#allocation7 + $0x1c] sm:$0xf]
        %v1315 = vld [vmem:[#allocation7 + $0x20] sm:$0xf]
        %v1316 = vld [vmem:[#allocation7 + $0x24] sm:$0xf]
        %v1317 = vld [vmem:[#allocation7 + $0x28] sm:$0xf]
        %v1318 = vld [vmem:[#allocation7 + $0x2c] sm:$0xf]
        %v1319 = vld [vmem:[#allocation7 + $0x30] sm:$0xf]
        %v1320 = vld [vmem:[#allocation7 + $0x34] sm:$0xf]
        %v1321 = vld [vmem:[#allocation7 + $0x38] sm:$0xf]
        %v1322 = vld [vmem:[#allocation7 + $0x3c] sm:$0xf]
        %v1323 = vld [vmem:[%s7] sm:$0x1]
        %v1340 = vunpack.c.l.b16 %v1307
        %v1341 = vunpack.c.l.b16 %v1308
        %v1342 = vunpack.c.l.b16 %v1309
        %v1343 = vunpack.c.l.b16 %v1310
        %v1344 = vunpack.c.l.b16 %v1311
        %v1345 = vunpack.c.l.b16 %v1312
        %v1346 = vunpack.c.l.b16 %v1313
        %v1347 = vunpack.c.l.b16 %v1314
        %v1348 = vunpack.c.l.b16 %v1315
        %v1349 = vunpack.c.l.b16 %v1316
        %v1350 = vunpack.c.l.b16 %v1317
        %v1351 = vunpack.c.l.b16 %v1318
        %v1352 = vunpack.c.l.b16 %v1319
        %v1353 = vunpack.c.l.b16 %v1320
        %v1354 = vunpack.c.l.b16 %v1321
        %v1355 = vunpack.c.l.b16 %v1322
        %v1356 = vpack.c.b16 %v1341, %v1340
        %v1357 = vpack.c.b16 %v1343, %v1342
        %v1358 = vpack.c.b16 %v1345, %v1344
        %v1359 = vpack.c.b16 %v1347, %v1346
        %v1360 = vpack.c.b16 %v1349, %v1348
        %v1361 = vpack.c.b16 %v1351, %v1350
        %v1362 = vpack.c.b16 %v1353, %v1352
        %v1363 = vpack.c.b16 %v1355, %v1354
        %1372 = vmatpush.bf16.msra.mxu0 %v1363
        %1373 = vmatpush.bf16.msra.mxu0 %v1362
        %1374 = vmatpush.bf16.msra.mxu0 %v1361
        %1375 = vmatpush.bf16.msra.mxu0 %v1360
        %1376 = vmatpush.bf16.msra.mxu0 %v1359
        %1377 = vmatpush.bf16.msra.mxu0 %v1358
        %1378 = vmatpush.bf16.msra.mxu0 %v1357
        %1379 = vmatpush.bf16.msra.mxu0 %v1356
        %1380 = vmatmul.bf16.gmra.mxu0 %v1306
        %v1381 = vpop.f32.mrf.mxu0
        %v1382 = vadd.f32 %v1323, %v1381
        %v1383 = vpop.f32.mrf.mxu0
        %1384 = vdwg.mxu0
        %v1387 = vrot.slane %v584, 1
        %v1388 = vrot.slane %v584, 2
        %v1389 = vrot.slane %v584, 3
        %v1390 = vrot.slane %v584, 4
        %v1391 = vrot.slane %v584, 5
        %v1392 = vrot.slane %v584, 6
        %v1393 = vrot.slane %v584, 7
        %v1394 = vperm.slane %v1382, 0
        %1395 = vst [vmem:[#allocation1] ss:$9 sm:$0xff] %v584
        %s1396 = scalar_lea.vmem [#allocation1], 1
        %1397 = vst [vmem:[%s1396] ss:$9 sm:$0xff] %v1387
        %s1398 = scalar_lea.vmem [#allocation1], 2
        %1399 = vst [vmem:[%s1398] ss:$9 sm:$0xff] %v1388
        %v1400 = vld [vmem:[#allocation1] sm:$0xff]
        %1401 = vst [vmem:[#allocation1] ss:$9 sm:$0xff] %v1389
        %1402 = vst [vmem:[%s1396] ss:$9 sm:$0xff] %v1390
        %1403 = vst [vmem:[%s1398] ss:$9 sm:$0xff] %v1391
        %v1404 = vld [vmem:[#allocation1] sm:$0xff]
        %1405 = vst [vmem:[#allocation1] ss:$9 sm:$0xff] %v1392
        %1406 = vst [vmem:[%s1396] ss:$9 sm:$0xff] %v1393
        %1407 = vst [vmem:[%s1398] ss:$9 sm:$0xff] %v585
        %v1408 = vld [vmem:[#allocation1] sm:$0xff]
        %v1412 = vadd.f32 %v1394, %v1400
        %v1413 = vadd.f32 %v1394, %v1404
        %v1414 = vadd.f32 %v1394, %v1408
        %v1415 = vmax.f32 %v1412, 0.0
        %v1416 = vmax.f32 %v1413, 0.0
        %v1417 = vmax.f32 %v1414, 0.0
        %v1421 = vrot.slane %v1415, 1
        %v1422 = vrot.slane %v1415, 2
        %v1423 = vrot.slane %v1416, 1
        %v1424 = vrot.slane %v1416, 2
        %v1425 = vrot.slane %v1417, 1
        %v1426 = vrot.slane %v1417, 2
        %1427 = vst [vmem:[#allocation1] ss:$9 sm:$0xff] %v1415
        %s1428 = scalar_lea.vmem [#allocation1], 1
        %1429 = vst [vmem:[%s1428] ss:$9 sm:$0xff] %v1421
        %s1430 = scalar_lea.vmem [#allocation1], 2
        %1431 = vst [vmem:[%s1430] ss:$9 sm:$0xff] %v1422
        %s1432 = scalar_lea.vmem [#allocation1], 3
        %1433 = vst [vmem:[%s1432] ss:$9 sm:$0xff] %v1416
        %s1434 = scalar_lea.vmem [#allocation1], 4
        %1435 = vst [vmem:[%s1434] ss:$9 sm:$0xff] %v1423
        %s1436 = scalar_lea.vmem [#allocation1], 5
        %1437 = vst [vmem:[%s1436] ss:$9 sm:$0xff] %v1424
        %s1438 = scalar_lea.vmem [#allocation1], 6
        %1439 = vst [vmem:[%s1438] ss:$9 sm:$0xff] %v1417
        %s1440 = scalar_lea.vmem [#allocation1], 7
        %1441 = vst [vmem:[%s1440] ss:$9 sm:$0xff] %v1425
        %v1442 = vld [vmem:[#allocation1] sm:$0xff]
        %1443 = vst [vmem:[#allocation1] ss:$9 sm:$0xff] %v1426
        %v1444 = vld [vmem:[#allocation1] sm:$0xff]
        %1447 = vst [vmem:[%s378] sm:$0xff] %v1442
        %1448 = vst [vmem:[%s378 + $0x8] sm:$0x1] %v1444
        %p1449 = scmp.lt.s32.totalorder %s24, 1
        %s1450 = scalar_select %p1449, %s24, 1
        %s1451 = smul.addr %s1450, 2
        %s1452 = smul.addr %s1451, 8
        %s1453 = scalar_lea.vmem %s8, %s1452
        // Predicated region
        $region69: #{tpu_custom_call.1} parent=51 // pred_check
          %p1454 = pneg %p215
        $region70: #{tpu_custom_call.1} parent=51 // pred_check_branch
          %1456 = sbr.rel (%p1454) target = $region72
        $region71: #{tpu_custom_call.1} parent=51 // pred_region
          _
        $region72: #{tpu_custom_call.1} parent=51 // pred_fallthru
          _
      $region52: #{tpu_custom_call.1} parent=5 // pred_fallthru
        _
      %p1457 = scmp.le.s32.totalorder 2, %s19
      // Predicated region
      $region73: #{tpu_custom_call.1} parent=5 // pred_check
        %p1458 = pneg %p1457
      $region74: #{tpu_custom_call.1} parent=5 // pred_check_branch
        %1460 = sbr.rel (%p1458) target = $region76
      $region75: #{tpu_custom_call.1} parent=5 // pred_region
        %s1461 = ssub.s32 %s19, 2
        // Predicated region
        $region77: #{tpu_custom_call.1} parent=75 // pred_check
          %p1462 = pneg %p221
        $region78: #{tpu_custom_call.1} parent=75 // pred_check_branch
          %1464 = sbr.rel (%p1462) target = $region80
        $region79: #{tpu_custom_call.1} parent=75 // pred_region
          %p1465 = scmp.lt.s32.totalorder %s25, 1
          %s1466 = scalar_select %p1465, %s25, 1
          %s1467 = smul.addr %s1466, 2
          %s1468 = smul.addr %s1467, 8
          %s1469 = scalar_lea.vmem %s8, %s1468
        $region80: #{tpu_custom_call.1} parent=75 // pred_fallthru
          _
      $region76: #{tpu_custom_call.1} parent=5 // pred_fallthru
        _
    $region6: #{tpu_custom_call.1} parent=1 // loop_footer
      %s23 = sadd.s32 1, %s19
    $region7: #{tpu_custom_call.1} parent=1 // loop_footer_branch
      %18 = sbr.rel target = $region3
    $region8: #{tpu_custom_call.1} parent=1 // loop_exit
      _
    %1470 = vsyncpa [#allocation3], 1
    %s1471 = scalar_lea.sflag [#allocation3], 1
    %1472 = vsyncpa %s1471, 1
    %1473 = vsyncpa [#allocation5], 1
    %1474 = vsyncpa [#allocation8], 1

</llo_original>
